<compile_context>
chip_gen: v6e
topology: v6e:2x2x1
jax: 0.10.0
libtpu: 0.0.40
codegen_flags: <defaults>
</compile_context>

<pallas_src>
import functools

import jax
import jax.numpy as jnp
from jax.experimental import pallas as pl
from jax.experimental.pallas import tpu as pltpu


_TILE = 256                       # row / reduction tile (f32 friendly)
_LANE = 128                       # feature padding granularity
_VMEM_LIMIT = 48 * 1024 * 1024    # explicit budget, fits v7x's 64 MiB VMEM


def _round_up(x, m):
    return (x + m - 1) // m * m


def _pad2d(x, rows, cols):
    return jnp.pad(x, ((0, rows - x.shape[0]), (0, cols - x.shape[1])))


# --------------------------------------------------------------------------
# Stage 1: XW_scaled = diag(d^{-1/2}) @ (X @ W)          (small feature dims)
# --------------------------------------------------------------------------
def _xw_kernel(dinv_ref, x_ref, w_ref, o_ref):
    xw = jnp.dot(x_ref[...], w_ref[...], preferred_element_type=jnp.float32)
    o_ref[...] = (xw * dinv_ref[...]).astype(o_ref.dtype)


def _xw_call(dinv, x, w):
    np_, fi = x.shape
    fo = w.shape[1]
    tm = min(_TILE, np_)
    grid = (np_ // tm,)
    return pl.pallas_call(
        _xw_kernel,
        out_shape=jax.ShapeDtypeStruct((np_, fo), x.dtype),
        grid_spec=pltpu.PrefetchScalarGridSpec(
            num_scalar_prefetch=0,
            grid=grid,
            in_specs=[
                pl.BlockSpec((tm, 1), lambda i: (i, 0)),    # d^{-1/2} rows
                pl.BlockSpec((tm, fi), lambda i: (i, 0)),   # X row tile
                pl.BlockSpec((fi, fo), lambda i: (0, 0)),   # whole W (small)
            ],
            out_specs=pl.BlockSpec((tm, fo), lambda i: (i, 0)),
        ),
        compiler_params=pltpu.CompilerParams(
            dimension_semantics=("parallel",),
            vmem_limit_bytes=_VMEM_LIMIT,
        ),
    )(dinv, x, w)


# --------------------------------------------------------------------------
# Stage 2: out = relu( diag(d^{-1/2}) @ (A @ XW_scaled) + b )      (tiled k)
# --------------------------------------------------------------------------
def _agg_kernel(dinv_ref, a_ref, xw_ref, b_ref, o_ref, acc_ref):
    k = pl.program_id(2)

    @pl.when(k == 0)
    def _():
        acc_ref[...] = jnp.zeros_like(acc_ref)

    acc_ref[...] += jnp.dot(a_ref[...], xw_ref[...],
                            preferred_element_type=jnp.float32)

    @pl.when(k == pl.num_programs(2) - 1)
    def _():
        h = acc_ref[...] * dinv_ref[...] + b_ref[...]
        o_ref[...] = jnp.maximum(h, 0.0).astype(o_ref.dtype)


def _agg_call(dinv, a, xw, b):
    np_ = a.shape[0]
    fo = xw.shape[1]
    tm = min(_TILE, np_)
    tk = min(_TILE, np_)
    tn = 256 if fo % 256 == 0 else 128
    grid = (np_ // tm, fo // tn, np_ // tk)
    return pl.pallas_call(
        _agg_kernel,
        out_shape=jax.ShapeDtypeStruct((np_, fo), jnp.float32),
        grid_spec=pltpu.PrefetchScalarGridSpec(
            num_scalar_prefetch=0,
            grid=grid,
            in_specs=[
                pl.BlockSpec((tm, 1), lambda i, j, k: (i, 0)),   # d^{-1/2}
                pl.BlockSpec((tm, tk), lambda i, j, k: (i, k)),  # A tile
                pl.BlockSpec((tk, tn), lambda i, j, k: (k, j)),  # XW tile
                pl.BlockSpec((1, tn), lambda i, j, k: (0, j)),   # bias tile
            ],
            out_specs=pl.BlockSpec((tm, tn), lambda i, j, k: (i, j)),
            scratch_shapes=[pltpu.VMEM((tm, tn), jnp.float32)],
        ),
        compiler_params=pltpu.CompilerParams(
            dimension_semantics=("parallel", "parallel", "arbitrary"),
            vmem_limit_bytes=_VMEM_LIMIT,
        ),
    )(dinv, a, xw, b)


# --------------------------------------------------------------------------
# Forward pass glue
# --------------------------------------------------------------------------
def symmetric_normalize(adj):
    """Reference only: A_norm = D^{-1/2} A D^{-1/2} (never materialized in
    the kernel path)."""
    deg = jnp.sum(adj, axis=1)
    d_inv_sqrt = jnp.where(deg > 0, 1.0 / jnp.sqrt(deg), 0.0)
    return adj * d_inv_sqrt[:, None] * d_inv_sqrt[None, :]


@functools.partial(jax.jit, static_argnames=("compute_dtype",))
def gcn_dgl_forward(adj, feat, params, compute_dtype=jnp.float32):
    """Forward of GCN_dgl: feat is [1, N, n_in] (squeeze(0) like the module).

    `compute_dtype=jnp.bfloat16` halves HBM traffic for the adjacency on
    v6e/v7x; accumulation is always f32.
    """
    h = jnp.squeeze(feat, axis=0)                       # [N, n_in]
    n = adj.shape[0]
    n_out = params[-1][0].shape[1]

    # Unmaterialized symmetric normalization: raw A + d^{-1/2} vector.
    deg = jnp.sum(adj, axis=1)
    d_inv_sqrt = jnp.where(deg > 0.0, 1.0 / jnp.sqrt(deg), 0.0)

    np_ = _round_up(n, _TILE)
    a_p = _pad2d(adj, np_, np_).astype(compute_dtype)
    dinv_p = _pad2d(d_inv_sqrt[:, None], np_, 1).astype(jnp.float32)

    fi0 = _round_up(params[0][0].shape[0], _LANE)
    h = _pad2d(h, np_, fi0)                             # lane-dense, padded N

    for (w, b) in params:
        f_in, f_out = w.shape
        fi = _round_up(f_in, _LANE)
        fo = _round_up(f_out, _LANE)
        w_p = _pad2d(w, fi, fo).astype(compute_dtype)
        b_p = _pad2d(b.reshape(1, -1), 1, fo).astype(jnp.float32)

        xw = _xw_call(dinv_p, h.astype(compute_dtype), w_p)   # [Np, Fo]
        h = _agg_call(dinv_p, a_p, xw, b_p)                   # [Np, Fo] f32
        # TODO(synk): fusing all layers into one pallas_call (A resident in
        # VMEM across layers) needs a full-barrier between layers; kept as
        # one tiled call per layer.

    return h[:n, :n_out]


def init_params(key, n_in, n_h, n_layers):
    params = []
    dims = [n_in] + [n_h] * n_layers
    for i in range(n_layers):
        key, kw, _ = jax.random.split(key, 3)
        fan_in, fan_out = dims[i], dims[i + 1]
        limit = jnp.sqrt(6.0 / (fan_in + fan_out))      # xavier-uniform-ish
        w = jax.random.uniform(kw, (fan_in, fan_out), jnp.float32, -limit, limit)
        b = jnp.zeros((1, fan_out), jnp.float32)        # GraphConv bias init
        params.append((w, b))
    return params


if __name__ == "__main__":
    key = jax.random.PRNGKey(0)
    N, n_in, n_h, n_layers = 16, 16, 32, 2

    k_adj, k_feat, k_par = jax.random.split(key, 3)

    # Random undirected graph with self-loops as a dense adjacency [N, N].
    logits = jax.random.uniform(k_adj, (N, N))
    adj = (logits + logits.T > 1.0).astype(jnp.float32)
    adj = jnp.maximum(adj, jnp.eye(N, dtype=jnp.float32))

    # feat has a leading singleton dim, matching `feat.squeeze(0)` in forward.
    feat = jax.random.normal(k_feat, (1, N, n_in), jnp.float32)

    params = init_params(k_par, n_in, n_h, n_layers)

    out = gcn_dgl_forward(adj, feat, tuple(params))
    jax.block_until_ready(out)

    # Pure-JAX reference check of the same math.
    a_norm = symmetric_normalize(adj)
    h_ref = jnp.squeeze(feat, axis=0)
    for (w, b) in params:
        h_ref = jnp.maximum(a_norm @ (h_ref @ w) + b, 0.0)

    assert out.shape == (N, n_h)
    assert jnp.allclose(out, h_ref, atol=1e-4, rtol=1e-4)

    print("KERNEL_OK")
</pallas_src>

<mosaic_0001>
module attributes {stable_mosaic.version = 11 : i64} {
  func.func @_xw_kernel(%arg0: i32, %arg1: memref<256x1xf32, #tpu.memory_space<vmem>>, %arg2: memref<256x128xf32, #tpu.memory_space<vmem>>, %arg3: memref<128x128xf32, #tpu.memory_space<vmem>>, %arg4: memref<256x128xf32, #tpu.memory_space<vmem>>) attributes {dimension_semantics = [#tpu.dimension_semantics<parallel>], iteration_bounds = array<i64: 1>, scalar_prefetch = 0 : i64, scratch_operands = 0 : i64, tpu.core_type = #tpu.core_type<tc>, window_params = [{transform_indices = @transform_0, window_bounds = array<i64: 256, 1>}, {transform_indices = @transform_1, window_bounds = array<i64: 256, 128>}, {pipeline_mode = #tpu.pipeline_mode<synchronous>, transform_indices = @transform_2, window_bounds = array<i64: 128, 128>}, {transform_indices = @transform_3, window_bounds = array<i64: 256, 128>}]} {
    %c0 = arith.constant 0 : index
    %c0_0 = arith.constant 0 : index
    %0 = vector.load %arg2[%c0, %c0_0] : memref<256x128xf32, #tpu.memory_space<vmem>>, vector<256x128xf32>
    %c0_1 = arith.constant 0 : index
    %c0_2 = arith.constant 0 : index
    %1 = vector.load %arg3[%c0_1, %c0_2] : memref<128x128xf32, #tpu.memory_space<vmem>>, vector<128x128xf32>
    %cst = arith.constant dense<0.000000e+00> : vector<256x128xf32>
    %2 = tpu.matmul %0, %1, %cst {dimension_numbers = #tpu.dot_dimension_numbers<[1], [0], [0], [1], [0, 0, 1, 1], [], []>} : vector<256x128xf32>, vector<128x128xf32>, vector<256x128xf32> -> vector<256x128xf32>
    %c0_3 = arith.constant 0 : index
    %c0_4 = arith.constant 0 : index
    %3 = vector.load %arg1[%c0_3, %c0_4] : memref<256x1xf32, #tpu.memory_space<vmem>>, vector<256x1xf32>
    %4 = vector.broadcast %3 : vector<256x1xf32> to vector<256x128xf32>
    %5 = arith.mulf %2, %4 : vector<256x128xf32>
    %c0_5 = arith.constant 0 : index
    %c0_6 = arith.constant 0 : index
    %6 = vector.load %arg4[%c0_5, %c0_6] : memref<256x128xf32, #tpu.memory_space<vmem>>, vector<256x128xf32>
    tpu.vector_store %arg4[%c0_5, %c0_6], %5 {strides = array<i32>} : memref<256x128xf32, #tpu.memory_space<vmem>>, vector<256x128xf32>,
    return
  }
  func.func @transform_0(%arg0: i32) -> (i32, i32) {
    %c0_i32 = arith.constant 0 : i32
    %c0_i32_0 = arith.constant 0 : i32
    return %arg0, %c0_i32 : i32, i32
  }
  func.func @transform_1(%arg0: i32) -> (i32, i32) {
    %c0_i32 = arith.constant 0 : i32
    %c0_i32_0 = arith.constant 0 : i32
    return %arg0, %c0_i32 : i32, i32
  }
  func.func @transform_2(%arg0: i32) -> (i32, i32) {
    %c0_i32 = arith.constant 0 : i32
    %c0_i32_0 = arith.constant 0 : i32
    %c0_i32_1 = arith.constant 0 : i32
    return %c0_i32, %c0_i32_0 : i32, i32
  }
  func.func @transform_3(%arg0: i32) -> (i32, i32) {
    %c0_i32 = arith.constant 0 : i32
    %c0_i32_0 = arith.constant 0 : i32
    return %arg0, %c0_i32 : i32, i32
  }
}

module attributes {stable_mosaic.version = 11 : i64} {
  func.func @_agg_kernel(%arg0: i32, %arg1: i32, %arg2: i32, %arg3: memref<256x1xf32, #tpu.memory_space<vmem>>, %arg4: memref<256x256xf32, #tpu.memory_space<vmem>>, %arg5: memref<256x128xf32, #tpu.memory_space<vmem>>, %arg6: memref<1x128xf32, #tpu.memory_space<vmem>>, %arg7: memref<256x128xf32, #tpu.memory_space<vmem>>, %arg8: memref<256x128xf32, #tpu.memory_space<vmem>>) attributes {dimension_semantics = [#tpu.dimension_semantics<parallel>, #tpu.dimension_semantics<parallel>, #tpu.dimension_semantics<arbitrary>], iteration_bounds = array<i64: 1, 1, 1>, scalar_prefetch = 0 : i64, scratch_operands = 1 : i64, tpu.core_type = #tpu.core_type<tc>, window_params = [{transform_indices = @transform_0, window_bounds = array<i64: 256, 1>}, {transform_indices = @transform_1, window_bounds = array<i64: 256, 256>}, {transform_indices = @transform_2, window_bounds = array<i64: 256, 128>}, {transform_indices = @transform_3, window_bounds = array<i64: 1, 128>}, {transform_indices = @transform_4, window_bounds = array<i64: 256, 128>}]} {
    %c0_i32 = arith.constant 0 : i32
    %0 = arith.cmpi eq, %arg2, %c0_i32 : i32
    %1 = arith.extui %0 : i1 to i32
    %c0_i32_0 = arith.constant 0 : i32
    %2 = arith.cmpi ne, %1, %c0_i32_0 : i32
    scf.if %2 {
      %cst_10 = arith.constant 0.000000e+00 : f32
      %12 = vector.broadcast %cst_10 : f32 to vector<256x128xf32>
      %c0_11 = arith.constant 0 : index
      %c0_12 = arith.constant 0 : index
      %13 = vector.load %arg8[%c0_11, %c0_12] : memref<256x128xf32, #tpu.memory_space<vmem>>, vector<256x128xf32>
      tpu.vector_store %arg8[%c0_11, %c0_12], %12 {strides = array<i32>} : memref<256x128xf32, #tpu.memory_space<vmem>>, vector<256x128xf32>,
    } else {
    }
    %c0 = arith.constant 0 : index
    %c0_1 = arith.constant 0 : index
    %3 = vector.load %arg8[%c0, %c0_1] : memref<256x128xf32, #tpu.memory_space<vmem>>, vector<256x128xf32>
    %c0_2 = arith.constant 0 : index
    %c0_3 = arith.constant 0 : index
    %4 = vector.load %arg4[%c0_2, %c0_3] : memref<256x256xf32, #tpu.memory_space<vmem>>, vector<256x256xf32>
    %c0_4 = arith.constant 0 : index
    %c0_5 = arith.constant 0 : index
    %5 = vector.load %arg5[%c0_4, %c0_5] : memref<256x128xf32, #tpu.memory_space<vmem>>, vector<256x128xf32>
    %cst = arith.constant dense<0.000000e+00> : vector<256x128xf32>
    %6 = tpu.matmul %4, %5, %cst {dimension_numbers = #tpu.dot_dimension_numbers<[1], [0], [0], [1], [0, 0, 1, 1], [], []>} : vector<256x256xf32>, vector<256x128xf32>, vector<256x128xf32> -> vector<256x128xf32>
    %7 = arith.addf %3, %6 : vector<256x128xf32>
    %c0_6 = arith.constant 0 : index
    %c0_7 = arith.constant 0 : index
    %8 = vector.load %arg8[%c0_6, %c0_7] : memref<256x128xf32, #tpu.memory_space<vmem>>, vector<256x128xf32>
    tpu.vector_store %arg8[%c0_6, %c0_7], %7 {strides = array<i32>} : memref<256x128xf32, #tpu.memory_space<vmem>>, vector<256x128xf32>,
    %c0_i32_8 = arith.constant 0 : i32
    %9 = arith.cmpi eq, %arg2, %c0_i32_8 : i32
    %10 = arith.extui %9 : i1 to i32
    %c0_i32_9 = arith.constant 0 : i32
    %11 = arith.cmpi ne, %10, %c0_i32_9 : i32
    scf.if %11 {
      %c0_10 = arith.constant 0 : index
      %c0_11 = arith.constant 0 : index
      %12 = vector.load %arg8[%c0_10, %c0_11] : memref<256x128xf32, #tpu.memory_space<vmem>>, vector<256x128xf32>
      %c0_12 = arith.constant 0 : index
      %c0_13 = arith.constant 0 : index
      %13 = vector.load %arg3[%c0_12, %c0_13] : memref<256x1xf32, #tpu.memory_space<vmem>>, vector<256x1xf32>
      %14 = vector.broadcast %13 : vector<256x1xf32> to vector<256x128xf32>
      %15 = arith.mulf %12, %14 : vector<256x128xf32>
      %c0_14 = arith.constant 0 : index
      %c0_15 = arith.constant 0 : index
      %16 = vector.load %arg6[%c0_14, %c0_15] : memref<1x128xf32, #tpu.memory_space<vmem>>, vector<1x128xf32>
      %17 = vector.broadcast %16 : vector<1x128xf32> to vector<256x128xf32>
      %18 = arith.addf %15, %17 : vector<256x128xf32>
      %cst_16 = arith.constant 0.000000e+00 : f32
      %19 = vector.broadcast %cst_16 : f32 to vector<256x128xf32>
      %20 = arith.maximumf %18, %19 : vector<256x128xf32>
      %c0_17 = arith.constant 0 : index
      %c0_18 = arith.constant 0 : index
      %21 = vector.load %arg7[%c0_17, %c0_18] : memref<256x128xf32, #tpu.memory_space<vmem>>, vector<256x128xf32>
      tpu.vector_store %arg7[%c0_17, %c0_18], %20 {strides = array<i32>} : memref<256x128xf32, #tpu.memory_space<vmem>>, vector<256x128xf32>,
    } else {
    }
    return
  }
  func.func @transform_0(%arg0: i32, %arg1: i32, %arg2: i32) -> (i32, i32) {
    %c0_i32 = arith.constant 0 : i32
    %c0_i32_0 = arith.constant 0 : i32
    return %arg0, %c0_i32 : i32, i32
  }
  func.func @transform_1(%arg0: i32, %arg1: i32, %arg2: i32) -> (i32, i32) {
    %c0_i32 = arith.constant 0 : i32
    return %arg0, %arg2 : i32, i32
  }
  func.func @transform_2(%arg0: i32, %arg1: i32, %arg2: i32) -> (i32, i32) {
    %c0_i32 = arith.constant 0 : i32
    return %arg2, %arg1 : i32, i32
  }
  func.func @transform_3(%arg0: i32, %arg1: i32, %arg2: i32) -> (i32, i32) {
    %c0_i32 = arith.constant 0 : i32
    %c0_i32_0 = arith.constant 0 : i32
    return %c0_i32, %arg1 : i32, i32
  }
  func.func @transform_4(%arg0: i32, %arg1: i32, %arg2: i32) -> (i32, i32) {
    %c0_i32 = arith.constant 0 : i32
    return %arg0, %arg1 : i32, i32
  }
}

</mosaic_0001>

<llo_original>
// kernel: gcn_dgl_forward.4
$region0: #{gcn_dgl_forward.4}
  #allocation0 [shape = 'u32[]', space=smem, size = 0x4, offset = 0x4, fixed_abs, tag = 'smem constant byte address 0x4 - core index']
  #allocation1 [shape = 'u32[144,128]{1,0:T(1,128)}', space=vmem, size = 0x12000, scoped, tag = 'internal scratch']
  %s0 = inlined_call_operand.vmem [shape: f32[256,1], index: 0, kind: input, shape index: {}]
  %s1 = inlined_call_operand.vmem [shape: f32[256,128], index: 1, kind: input, shape index: {}]
  %s2 = inlined_call_operand.vmem [shape: f32[128,128], index: 2, kind: input, shape index: {}]
  %s3 = inlined_call_operand.vmem [shape: f32[256,128], index: 3, kind: output, shape index: {}]
  %s4 = sld [smem:[#allocation0]]
  $region22: #{gcn_dgl_forward.4} parent=0
    _
  %s6 = ssub.s32 1, %s4
  %s7 = scalar_select 0, %s6, %s4
  // Predicated region
  $region2: #{gcn_dgl_forward.4} parent=0 // pred_check
    _
  $region3: #{gcn_dgl_forward.4} parent=0 // pred_check_branch
    %9 = sbr.rel (0) target = $region5
  $region4: #{gcn_dgl_forward.4} parent=0 // pred_region
    _
  $region5: #{gcn_dgl_forward.4} parent=0 // pred_fallthru
    _
  // Predicated region
  $region6: #{gcn_dgl_forward.4} parent=0 // pred_check
    _
  $region7: #{gcn_dgl_forward.4} parent=0 // pred_check_branch
    %11 = sbr.rel (0) target = $region9
  $region8: #{gcn_dgl_forward.4} parent=0 // pred_region
    _
  $region9: #{gcn_dgl_forward.4} parent=0 // pred_fallthru
    _
  // Predicated region
  $region10: #{gcn_dgl_forward.4} parent=0 // pred_check
    _
  $region11: #{gcn_dgl_forward.4} parent=0 // pred_check_branch
    %13 = sbr.rel (0) target = $region13
  $region12: #{gcn_dgl_forward.4} parent=0 // pred_region
    _
  $region13: #{gcn_dgl_forward.4} parent=0 // pred_fallthru
    _
  %v14 = vld [vmem:[%s1] sm:$0xff]
  %v15 = vld [vmem:[%s1 + $0x8] sm:$0xff]
  %v16 = vld [vmem:[%s1 + $0x10] sm:$0xff]
  %v17 = vld [vmem:[%s1 + $0x18] sm:$0xff]
  %v18 = vld [vmem:[%s1 + $0x20] sm:$0xff]
  %v19 = vld [vmem:[%s1 + $0x28] sm:$0xff]
  %v20 = vld [vmem:[%s1 + $0x30] sm:$0xff]
  %v21 = vld [vmem:[%s1 + $0x38] sm:$0xff]
  %v22 = vld [vmem:[%s1 + $0x40] sm:$0xff]
  %v23 = vld [vmem:[%s1 + $0x48] sm:$0xff]
  %v24 = vld [vmem:[%s1 + $0x50] sm:$0xff]
  %v25 = vld [vmem:[%s1 + $0x58] sm:$0xff]
  %v26 = vld [vmem:[%s1 + $0x60] sm:$0xff]
  %v27 = vld [vmem:[%s1 + $0x68] sm:$0xff]
  %v28 = vld [vmem:[%s1 + $0x70] sm:$0xff]
  %v29 = vld [vmem:[%s1 + $0x78] sm:$0xff]
  %v30 = vld [vmem:[%s1 + $0x80] sm:$0xff]
  %v31 = vld [vmem:[%s1 + $0x88] sm:$0xff]
  %v32 = vld [vmem:[%s1 + $0x90] sm:$0xff]
  %v33 = vld [vmem:[%s1 + $0x98] sm:$0xff]
  %v34 = vld [vmem:[%s1 + $0xa0] sm:$0xff]
  %v35 = vld [vmem:[%s1 + $0xa8] sm:$0xff]
  %v36 = vld [vmem:[%s1 + $0xb0] sm:$0xff]
  %v37 = vld [vmem:[%s1 + $0xb8] sm:$0xff]
  %v38 = vld [vmem:[%s1 + $0xc0] sm:$0xff]
  %v39 = vld [vmem:[%s1 + $0xc8] sm:$0xff]
  %v40 = vld [vmem:[%s1 + $0xd0] sm:$0xff]
  %v41 = vld [vmem:[%s1 + $0xd8] sm:$0xff]
  %v42 = vld [vmem:[%s1 + $0xe0] sm:$0xff]
  %v43 = vld [vmem:[%s1 + $0xe8] sm:$0xff]
  %v44 = vld [vmem:[%s1 + $0xf0] sm:$0xff]
  %v45 = vld [vmem:[%s1 + $0xf8] sm:$0xff]
  %v46 = vld [vmem:[%s2] sm:$0xff]
  %v47 = vld [vmem:[%s2 + $0x8] sm:$0xff]
  %v48 = vld [vmem:[%s2 + $0x10] sm:$0xff]
  %v49 = vld [vmem:[%s2 + $0x18] sm:$0xff]
  %v50 = vld [vmem:[%s2 + $0x20] sm:$0xff]
  %v51 = vld [vmem:[%s2 + $0x28] sm:$0xff]
  %v52 = vld [vmem:[%s2 + $0x30] sm:$0xff]
  %v53 = vld [vmem:[%s2 + $0x38] sm:$0xff]
  %v54 = vld [vmem:[%s2 + $0x40] sm:$0xff]
  %v55 = vld [vmem:[%s2 + $0x48] sm:$0xff]
  %v56 = vld [vmem:[%s2 + $0x50] sm:$0xff]
  %v57 = vld [vmem:[%s2 + $0x58] sm:$0xff]
  %v58 = vld [vmem:[%s2 + $0x60] sm:$0xff]
  %v59 = vld [vmem:[%s2 + $0x68] sm:$0xff]
  %v60 = vld [vmem:[%s2 + $0x70] sm:$0xff]
  %v61 = vld [vmem:[%s2 + $0x78] sm:$0xff]
  %62 = vmatprep.subr.mxu0 0.0
  %63 = vmatpush1.msra.mxu0 %v61
  %64 = vmatprep.subr.mxu0 0.0
  %65 = vmatpush1.msra.mxu0 %v60
  %66 = vmatprep.subr.mxu0 0.0
  %67 = vmatpush1.msra.mxu0 %v59
  %68 = vmatprep.subr.mxu0 0.0
  %69 = vmatpush1.msra.mxu0 %v58
  %70 = vmatprep.subr.mxu0 0.0
  %71 = vmatpush1.msra.mxu0 %v57
  %72 = vmatprep.subr.mxu0 0.0
  %73 = vmatpush1.msra.mxu0 %v56
  %74 = vmatprep.subr.mxu0 0.0
  %75 = vmatpush1.msra.mxu0 %v55
  %76 = vmatprep.subr.mxu0 0.0
  %77 = vmatpush1.msra.mxu0 %v54
  %78 = vmatprep.subr.mxu0 0.0
  %79 = vmatpush1.msra.mxu0 %v53
  %80 = vmatprep.subr.mxu0 0.0
  %81 = vmatpush1.msra.mxu0 %v52
  %82 = vmatprep.subr.mxu0 0.0
  %83 = vmatpush1.msra.mxu0 %v51
  %84 = vmatprep.subr.mxu0 0.0
  %85 = vmatpush1.msra.mxu0 %v50
  %86 = vmatprep.subr.mxu0 0.0
  %87 = vmatpush1.msra.mxu0 %v49
  %88 = vmatprep.subr.mxu0 0.0
  %89 = vmatpush1.msra.mxu0 %v48
  %90 = vmatprep.subr.mxu0 0.0
  %91 = vmatpush1.msra.mxu0 %v47
  %92 = vmatprep.subr.mxu0 0.0
  %93 = vmatpush1.msra.mxu0 %v46
  %94 = vmatprep.subr.mxu0 0.0
  %95 = vmatpush2.msra.mxu0 0.0
  %96 = vmatprep.subr.mxu0 0.0
  %97 = vmatpush2.msra.mxu0 0.0
  %98 = vmatprep.subr.mxu0 0.0
  %99 = vmatpush2.msra.mxu0 0.0
  %100 = vmatprep.subr.mxu0 0.0
  %101 = vmatpush2.msra.mxu0 0.0
  %102 = vmatprep.subr.mxu0 0.0
  %103 = vmatpush2.msra.mxu0 0.0
  %104 = vmatprep.subr.mxu0 0.0
  %105 = vmatpush2.msra.mxu0 0.0
  %106 = vmatprep.subr.mxu0 0.0
  %107 = vmatpush2.msra.mxu0 0.0
  %108 = vmatprep.subr.mxu0 0.0
  %109 = vmatpush2.msra.mxu0 0.0
  %110 = vmatprep.subr.mxu0 0.0
  %111 = vmatpush2.msra.mxu0 0.0
  %112 = vmatprep.subr.mxu0 0.0
  %113 = vmatpush2.msra.mxu0 0.0
  %114 = vmatprep.subr.mxu0 0.0
  %115 = vmatpush2.msra.mxu0 0.0
  %116 = vmatprep.subr.mxu0 0.0
  %117 = vmatpush2.msra.mxu0 0.0
  %118 = vmatprep.subr.mxu0 0.0
  %119 = vmatpush2.msra.mxu0 0.0
  %120 = vmatprep.subr.mxu0 0.0
  %121 = vmatpush2.msra.mxu0 0.0
  %122 = vmatprep.subr.mxu0 0.0
  %123 = vmatpush2.msra.mxu0 0.0
  %124 = vmatprep.subr.mxu0 0.0
  %125 = vmatpush2.msra.mxu0 0.0
  %126 = vmatprep.mubr.f32.mxu0 0.0
  %127 = vmatmul.mubr.f32.gmra.mxu0 %v14
  %v128 = vpop.f32.mrf.mxu0
  %v129 = vadd.f32 0.0, %v128
  %v130 = vpop.f32.mrf.mxu0
  %131 = vmatprep.mubr.f32.mxu0 0.0
  %132 = vmatmul.mubr.f32.gmra.mxu0 %v15
  %v133 = vpop.f32.mrf.mxu0
  %v134 = vadd.f32 0.0, %v133
  %v135 = vpop.f32.mrf.mxu0
  %136 = vmatprep.mubr.f32.mxu0 0.0
  %137 = vmatmul.mubr.f32.gmra.mxu0 %v16
  %v138 = vpop.f32.mrf.mxu0
  %v139 = vadd.f32 0.0, %v138
  %v140 = vpop.f32.mrf.mxu0
  %141 = vmatprep.mubr.f32.mxu0 0.0
  %142 = vmatmul.mubr.f32.gmra.mxu0 %v17
  %v143 = vpop.f32.mrf.mxu0
  %v144 = vadd.f32 0.0, %v143
  %v145 = vpop.f32.mrf.mxu0
  %146 = vmatprep.mubr.f32.mxu0 0.0
  %147 = vmatmul.mubr.f32.gmra.mxu0 %v18
  %v148 = vpop.f32.mrf.mxu0
  %v149 = vadd.f32 0.0, %v148
  %v150 = vpop.f32.mrf.mxu0
  %151 = vmatprep.mubr.f32.mxu0 0.0
  %152 = vmatmul.mubr.f32.gmra.mxu0 %v19
  %v153 = vpop.f32.mrf.mxu0
  %v154 = vadd.f32 0.0, %v153
  %v155 = vpop.f32.mrf.mxu0
  %156 = vmatprep.mubr.f32.mxu0 0.0
  %157 = vmatmul.mubr.f32.gmra.mxu0 %v20
  %v158 = vpop.f32.mrf.mxu0
  %v159 = vadd.f32 0.0, %v158
  %v160 = vpop.f32.mrf.mxu0
  %161 = vmatprep.mubr.f32.mxu0 0.0
  %162 = vmatmul.mubr.f32.gmra.mxu0 %v21
  %v163 = vpop.f32.mrf.mxu0
  %v164 = vadd.f32 0.0, %v163
  %v165 = vpop.f32.mrf.mxu0
  %166 = vmatprep.mubr.f32.mxu0 0.0
  %167 = vmatmul.mubr.f32.gmra.mxu0 %v22
  %v168 = vpop.f32.mrf.mxu0
  %v169 = vadd.f32 0.0, %v168
  %v170 = vpop.f32.mrf.mxu0
  %171 = vmatprep.mubr.f32.mxu0 0.0
  %172 = vmatmul.mubr.f32.gmra.mxu0 %v23
  %v173 = vpop.f32.mrf.mxu0
  %v174 = vadd.f32 0.0, %v173
  %v175 = vpop.f32.mrf.mxu0
  %176 = vmatprep.mubr.f32.mxu0 0.0
  %177 = vmatmul.mubr.f32.gmra.mxu0 %v24
  %v178 = vpop.f32.mrf.mxu0
  %v179 = vadd.f32 0.0, %v178
  %v180 = vpop.f32.mrf.mxu0
  %181 = vmatprep.mubr.f32.mxu0 0.0
  %182 = vmatmul.mubr.f32.gmra.mxu0 %v25
  %v183 = vpop.f32.mrf.mxu0
  %v184 = vadd.f32 0.0, %v183
  %v185 = vpop.f32.mrf.mxu0
  %186 = vmatprep.mubr.f32.mxu0 0.0
  %187 = vmatmul.mubr.f32.gmra.mxu0 %v26
  %v188 = vpop.f32.mrf.mxu0
  %v189 = vadd.f32 0.0, %v188
  %v190 = vpop.f32.mrf.mxu0
  %191 = vmatprep.mubr.f32.mxu0 0.0
  %192 = vmatmul.mubr.f32.gmra.mxu0 %v27
  %v193 = vpop.f32.mrf.mxu0
  %v194 = vadd.f32 0.0, %v193
  %v195 = vpop.f32.mrf.mxu0
  %196 = vmatprep.mubr.f32.mxu0 0.0
  %197 = vmatmul.mubr.f32.gmra.mxu0 %v28
  %v198 = vpop.f32.mrf.mxu0
  %v199 = vadd.f32 0.0, %v198
  %v200 = vpop.f32.mrf.mxu0
  %201 = vmatprep.mubr.f32.mxu0 0.0
  %202 = vmatmul.mubr.f32.gmra.mxu0 %v29
  %v203 = vpop.f32.mrf.mxu0
  %v204 = vadd.f32 0.0, %v203
  %v205 = vpop.f32.mrf.mxu0
  %206 = vmatprep.mubr.f32.mxu0 0.0
  %207 = vmatmul.mubr.f32.gmra.mxu0 %v30
  %v208 = vpop.f32.mrf.mxu0
  %v209 = vadd.f32 0.0, %v208
  %v210 = vpop.f32.mrf.mxu0
  %211 = vmatprep.mubr.f32.mxu0 0.0
  %212 = vmatmul.mubr.f32.gmra.mxu0 %v31
  %v213 = vpop.f32.mrf.mxu0
  %v214 = vadd.f32 0.0, %v213
  %v215 = vpop.f32.mrf.mxu0
  %216 = vmatprep.mubr.f32.mxu0 0.0
  %217 = vmatmul.mubr.f32.gmra.mxu0 %v32
  %v218 = vpop.f32.mrf.mxu0
  %v219 = vadd.f32 0.0, %v218
  %v220 = vpop.f32.mrf.mxu0
  %221 = vmatprep.mubr.f32.mxu0 0.0
  %222 = vmatmul.mubr.f32.gmra.mxu0 %v33
  %v223 = vpop.f32.mrf.mxu0
  %v224 = vadd.f32 0.0, %v223
  %v225 = vpop.f32.mrf.mxu0
  %226 = vmatprep.mubr.f32.mxu0 0.0
  %227 = vmatmul.mubr.f32.gmra.mxu0 %v34
  %v228 = vpop.f32.mrf.mxu0
  %v229 = vadd.f32 0.0, %v228
  %v230 = vpop.f32.mrf.mxu0
  %231 = vmatprep.mubr.f32.mxu0 0.0
  %232 = vmatmul.mubr.f32.gmra.mxu0 %v35
  %v233 = vpop.f32.mrf.mxu0
  %v234 = vadd.f32 0.0, %v233
  %v235 = vpop.f32.mrf.mxu0
  %236 = vmatprep.mubr.f32.mxu0 0.0
  %237 = vmatmul.mubr.f32.gmra.mxu0 %v36
  %v238 = vpop.f32.mrf.mxu0
  %v239 = vadd.f32 0.0, %v238
  %v240 = vpop.f32.mrf.mxu0
  %241 = vmatprep.mubr.f32.mxu0 0.0
  %242 = vmatmul.mubr.f32.gmra.mxu0 %v37
  %v243 = vpop.f32.mrf.mxu0
  %v244 = vadd.f32 0.0, %v243
  %v245 = vpop.f32.mrf.mxu0
  %246 = vmatprep.mubr.f32.mxu0 0.0
  %247 = vmatmul.mubr.f32.gmra.mxu0 %v38
  %v248 = vpop.f32.mrf.mxu0
  %v249 = vadd.f32 0.0, %v248
  %v250 = vpop.f32.mrf.mxu0
  %251 = vmatprep.mubr.f32.mxu0 0.0
  %252 = vmatmul.mubr.f32.gmra.mxu0 %v39
  %v253 = vpop.f32.mrf.mxu0
  %v254 = vadd.f32 0.0, %v253
  %v255 = vpop.f32.mrf.mxu0
  %256 = vmatprep.mubr.f32.mxu0 0.0
  %257 = vmatmul.mubr.f32.gmra.mxu0 %v40
  %v258 = vpop.f32.mrf.mxu0
  %v259 = vadd.f32 0.0, %v258
  %v260 = vpop.f32.mrf.mxu0
  %261 = vmatprep.mubr.f32.mxu0 0.0
  %262 = vmatmul.mubr.f32.gmra.mxu0 %v41
  %v263 = vpop.f32.mrf.mxu0
  %v264 = vadd.f32 0.0, %v263
  %v265 = vpop.f32.mrf.mxu0
  %266 = vmatprep.mubr.f32.mxu0 0.0
  %267 = vmatmul.mubr.f32.gmra.mxu0 %v42
  %v268 = vpop.f32.mrf.mxu0
  %v269 = vadd.f32 0.0, %v268
  %v270 = vpop.f32.mrf.mxu0
  %271 = vmatprep.mubr.f32.mxu0 0.0
  %272 = vmatmul.mubr.f32.gmra.mxu0 %v43
  %v273 = vpop.f32.mrf.mxu0
  %v274 = vadd.f32 0.0, %v273
  %v275 = vpop.f32.mrf.mxu0
  %276 = vmatprep.mubr.f32.mxu0 0.0
  %277 = vmatmul.mubr.f32.gmra.mxu0 %v44
  %v278 = vpop.f32.mrf.mxu0
  %v279 = vadd.f32 0.0, %v278
  %v280 = vpop.f32.mrf.mxu0
  %281 = vmatprep.mubr.f32.mxu0 0.0
  %282 = vmatmul.mubr.f32.gmra.mxu0 %v45
  %v283 = vpop.f32.mrf.mxu0
  %v284 = vadd.f32 0.0, %v283
  %v285 = vpop.f32.mrf.mxu0
  %286 = vdwg.mxu0
  %v287 = vld [vmem:[%s0] sm:$0xff]
  %v288 = vld [vmem:[%s0 + $0x8] sm:$0xff]
  %v289 = vld [vmem:[%s0 + $0x10] sm:$0xff]
  %v290 = vld [vmem:[%s0 + $0x18] sm:$0xff]
  %v291 = vld [vmem:[%s0 + $0x20] sm:$0xff]
  %v292 = vld [vmem:[%s0 + $0x28] sm:$0xff]
  %v293 = vld [vmem:[%s0 + $0x30] sm:$0xff]
  %v294 = vld [vmem:[%s0 + $0x38] sm:$0xff]
  %v295 = vld [vmem:[%s0 + $0x40] sm:$0xff]
  %v296 = vld [vmem:[%s0 + $0x48] sm:$0xff]
  %v297 = vld [vmem:[%s0 + $0x50] sm:$0xff]
  %v298 = vld [vmem:[%s0 + $0x58] sm:$0xff]
  %v299 = vld [vmem:[%s0 + $0x60] sm:$0xff]
  %v300 = vld [vmem:[%s0 + $0x68] sm:$0xff]
  %v301 = vld [vmem:[%s0 + $0x70] sm:$0xff]
  %v302 = vld [vmem:[%s0 + $0x78] sm:$0xff]
  %v303 = vld [vmem:[%s0 + $0x80] sm:$0xff]
  %v304 = vld [vmem:[%s0 + $0x88] sm:$0xff]
  %v305 = vld [vmem:[%s0 + $0x90] sm:$0xff]
  %v306 = vld [vmem:[%s0 + $0x98] sm:$0xff]
  %v307 = vld [vmem:[%s0 + $0xa0] sm:$0xff]
  %v308 = vld [vmem:[%s0 + $0xa8] sm:$0xff]
  %v309 = vld [vmem:[%s0 + $0xb0] sm:$0xff]
  %v310 = vld [vmem:[%s0 + $0xb8] sm:$0xff]
  %v311 = vld [vmem:[%s0 + $0xc0] sm:$0xff]
  %v312 = vld [vmem:[%s0 + $0xc8] sm:$0xff]
  %v313 = vld [vmem:[%s0 + $0xd0] sm:$0xff]
  %v314 = vld [vmem:[%s0 + $0xd8] sm:$0xff]
  %v315 = vld [vmem:[%s0 + $0xe0] sm:$0xff]
  %v316 = vld [vmem:[%s0 + $0xe8] sm:$0xff]
  %v317 = vld [vmem:[%s0 + $0xf0] sm:$0xff]
  %v318 = vld [vmem:[%s0 + $0xf8] sm:$0xff]
  %320 = vset.pattern.permute.xlu0 0
  %321 = vperm.xlu0 %320, %v287
  %v322 = vpop.permute.xlu0 %321
  %325 = vset.pattern.permute.xlu0 0
  %326 = vperm.xlu0 %325, %v288
  %v327 = vpop.permute.xlu0 %326
  %330 = vset.pattern.permute.xlu0 0
  %331 = vperm.xlu0 %330, %v289
  %v332 = vpop.permute.xlu0 %331
  %335 = vset.pattern.permute.xlu0 0
  %336 = vperm.xlu0 %335, %v290
  %v337 = vpop.permute.xlu0 %336
  %340 = vset.pattern.permute.xlu0 0
  %341 = vperm.xlu0 %340, %v291
  %v342 = vpop.permute.xlu0 %341
  %345 = vset.pattern.permute.xlu0 0
  %346 = vperm.xlu0 %345, %v292
  %v347 = vpop.permute.xlu0 %346
  %350 = vset.pattern.permute.xlu0 0
  %351 = vperm.xlu0 %350, %v293
  %v352 = vpop.permute.xlu0 %351
  %355 = vset.pattern.permute.xlu0 0
  %356 = vperm.xlu0 %355, %v294
  %v357 = vpop.permute.xlu0 %356
  %360 = vset.pattern.permute.xlu0 0
  %361 = vperm.xlu0 %360, %v295
  %v362 = vpop.permute.xlu0 %361
  %365 = vset.pattern.permute.xlu0 0
  %366 = vperm.xlu0 %365, %v296
  %v367 = vpop.permute.xlu0 %366
  %370 = vset.pattern.permute.xlu0 0
  %371 = vperm.xlu0 %370, %v297
  %v372 = vpop.permute.xlu0 %371
  %375 = vset.pattern.permute.xlu0 0
  %376 = vperm.xlu0 %375, %v298
  %v377 = vpop.permute.xlu0 %376
  %380 = vset.pattern.permute.xlu0 0
  %381 = vperm.xlu0 %380, %v299
  %v382 = vpop.permute.xlu0 %381
  %385 = vset.pattern.permute.xlu0 0
  %386 = vperm.xlu0 %385, %v300
  %v387 = vpop.permute.xlu0 %386
  %390 = vset.pattern.permute.xlu0 0
  %391 = vperm.xlu0 %390, %v301
  %v392 = vpop.permute.xlu0 %391
  %395 = vset.pattern.permute.xlu0 0
  %396 = vperm.xlu0 %395, %v302
  %v397 = vpop.permute.xlu0 %396
  %400 = vset.pattern.permute.xlu0 0
  %401 = vperm.xlu0 %400, %v303
  %v402 = vpop.permute.xlu0 %401
  %405 = vset.pattern.permute.xlu0 0
  %406 = vperm.xlu0 %405, %v304
  %v407 = vpop.permute.xlu0 %406
  %410 = vset.pattern.permute.xlu0 0
  %411 = vperm.xlu0 %410, %v305
  %v412 = vpop.permute.xlu0 %411
  %415 = vset.pattern.permute.xlu0 0
  %416 = vperm.xlu0 %415, %v306
  %v417 = vpop.permute.xlu0 %416
  %420 = vset.pattern.permute.xlu0 0
  %421 = vperm.xlu0 %420, %v307
  %v422 = vpop.permute.xlu0 %421
  %425 = vset.pattern.permute.xlu0 0
  %426 = vperm.xlu0 %425, %v308
  %v427 = vpop.permute.xlu0 %426
  %430 = vset.pattern.permute.xlu0 0
  %431 = vperm.xlu0 %430, %v309
  %v432 = vpop.permute.xlu0 %431
  %435 = vset.pattern.permute.xlu0 0
  %436 = vperm.xlu0 %435, %v310
  %v437 = vpop.permute.xlu0 %436
  %440 = vset.pattern.permute.xlu0 0
  %441 = vperm.xlu0 %440, %v311
  %v442 = vpop.permute.xlu0 %441
  %445 = vset.pattern.permute.xlu0 0
  %446 = vperm.xlu0 %445, %v312
  %v447 = vpop.permute.xlu0 %446
  %450 = vset.pattern.permute.xlu0 0
  %451 = vperm.xlu0 %450, %v313
  %v452 = vpop.permute.xlu0 %451
  %455 = vset.pattern.permute.xlu0 0
  %456 = vperm.xlu0 %455, %v314
  %v457 = vpop.permute.xlu0 %456
  %460 = vset.pattern.permute.xlu0 0
  %461 = vperm.xlu0 %460, %v315
  %v462 = vpop.permute.xlu0 %461
  %465 = vset.pattern.permute.xlu0 0
  %466 = vperm.xlu0 %465, %v316
  %v467 = vpop.permute.xlu0 %466
  %470 = vset.pattern.permute.xlu0 0
  %471 = vperm.xlu0 %470, %v317
  %v472 = vpop.permute.xlu0 %471
  %475 = vset.pattern.permute.xlu0 0
  %476 = vperm.xlu0 %475, %v318
  %v477 = vpop.permute.xlu0 %476
  %v479 = vmul.f32 %v129, %v322
  %v480 = vmul.f32 %v134, %v327
  %v481 = vmul.f32 %v139, %v332
  %v482 = vmul.f32 %v144, %v337
  %v483 = vmul.f32 %v149, %v342
  %v484 = vmul.f32 %v154, %v347
  %v485 = vmul.f32 %v159, %v352
  %v486 = vmul.f32 %v164, %v357
  %v487 = vmul.f32 %v169, %v362
  %v488 = vmul.f32 %v174, %v367
  %v489 = vmul.f32 %v179, %v372
  %v490 = vmul.f32 %v184, %v377
  %v491 = vmul.f32 %v189, %v382
  %v492 = vmul.f32 %v194, %v387
  %v493 = vmul.f32 %v199, %v392
  %v494 = vmul.f32 %v204, %v397
  %v495 = vmul.f32 %v209, %v402
  %v496 = vmul.f32 %v214, %v407
  %v497 = vmul.f32 %v219, %v412
  %v498 = vmul.f32 %v224, %v417
  %v499 = vmul.f32 %v229, %v422
  %v500 = vmul.f32 %v234, %v427
  %v501 = vmul.f32 %v239, %v432
  %v502 = vmul.f32 %v244, %v437
  %v503 = vmul.f32 %v249, %v442
  %v504 = vmul.f32 %v254, %v447
  %v505 = vmul.f32 %v259, %v452
  %v506 = vmul.f32 %v264, %v457
  %v507 = vmul.f32 %v269, %v462
  %v508 = vmul.f32 %v274, %v467
  %v509 = vmul.f32 %v279, %v472
  %v510 = vmul.f32 %v284, %v477
  %511 = vst [vmem:[%s3] sm:$0xff] %v479
  %512 = vst [vmem:[%s3 + $0x8] sm:$0xff] %v480
  %513 = vst [vmem:[%s3 + $0x10] sm:$0xff] %v481
  %514 = vst [vmem:[%s3 + $0x18] sm:$0xff] %v482
  %515 = vst [vmem:[%s3 + $0x20] sm:$0xff] %v483
  %516 = vst [vmem:[%s3 + $0x28] sm:$0xff] %v484
  %517 = vst [vmem:[%s3 + $0x30] sm:$0xff] %v485
  %518 = vst [vmem:[%s3 + $0x38] sm:$0xff] %v486
  %519 = vst [vmem:[%s3 + $0x40] sm:$0xff] %v487
  %520 = vst [vmem:[%s3 + $0x48] sm:$0xff] %v488
  %521 = vst [vmem:[%s3 + $0x50] sm:$0xff] %v489
  %522 = vst [vmem:[%s3 + $0x58] sm:$0xff] %v490
  %523 = vst [vmem:[%s3 + $0x60] sm:$0xff] %v491
  %524 = vst [vmem:[%s3 + $0x68] sm:$0xff] %v492
  %525 = vst [vmem:[%s3 + $0x70] sm:$0xff] %v493
  %526 = vst [vmem:[%s3 + $0x78] sm:$0xff] %v494
  %527 = vst [vmem:[%s3 + $0x80] sm:$0xff] %v495
  %528 = vst [vmem:[%s3 + $0x88] sm:$0xff] %v496
  %529 = vst [vmem:[%s3 + $0x90] sm:$0xff] %v497
  %530 = vst [vmem:[%s3 + $0x98] sm:$0xff] %v498
  %531 = vst [vmem:[%s3 + $0xa0] sm:$0xff] %v499
  %532 = vst [vmem:[%s3 + $0xa8] sm:$0xff] %v500
  %533 = vst [vmem:[%s3 + $0xb0] sm:$0xff] %v501
  %534 = vst [vmem:[%s3 + $0xb8] sm:$0xff] %v502
  %535 = vst [vmem:[%s3 + $0xc0] sm:$0xff] %v503
  %536 = vst [vmem:[%s3 + $0xc8] sm:$0xff] %v504
  %537 = vst [vmem:[%s3 + $0xd0] sm:$0xff] %v505
  %538 = vst [vmem:[%s3 + $0xd8] sm:$0xff] %v506
  %539 = vst [vmem:[%s3 + $0xe0] sm:$0xff] %v507
  %540 = vst [vmem:[%s3 + $0xe8] sm:$0xff] %v508
  %541 = vst [vmem:[%s3 + $0xf0] sm:$0xff] %v509
  %542 = vst [vmem:[%s3 + $0xf8] sm:$0xff] %v510
  // Predicated region
  $region14: #{gcn_dgl_forward.4} parent=0 // pred_check
    _
  $region15: #{gcn_dgl_forward.4} parent=0 // pred_check_branch
    %544 = sbr.rel (0) target = $region17
  $region16: #{gcn_dgl_forward.4} parent=0 // pred_region
    _
  $region17: #{gcn_dgl_forward.4} parent=0 // pred_fallthru
    _
  // Predicated region
  $region18: #{gcn_dgl_forward.4} parent=0 // pred_check
    _
  $region19: #{gcn_dgl_forward.4} parent=0 // pred_check_branch
    %546 = sbr.rel (0) target = $region21
  $region20: #{gcn_dgl_forward.4} parent=0 // pred_region
    _
  $region21: #{gcn_dgl_forward.4} parent=0 // pred_fallthru
    _

// kernel: gcn_dgl_forward.5
$region0: #{gcn_dgl_forward.5}
  #allocation0 [shape = 'u32[]', space=smem, size = 0x4, offset = 0x4, fixed_abs, tag = 'smem constant byte address 0x4 - core index']
  #allocation1 [shape = 'u32[144,128]{1,0:T(1,128)}', space=vmem, size = 0x12000, scoped, tag = 'internal scratch']
  #allocation2 [shape = 'f32[256,128]{1,0:T(8,128)}', space=vmem, size = 0x20000, scoped, tag = 'scratch operand']
  %s0 = inlined_call_operand.vmem [shape: f32[256,1], index: 0, kind: input, shape index: {}]
  %s1 = inlined_call_operand.vmem [shape: f32[256,256], index: 1, kind: input, shape index: {}]
  %s2 = inlined_call_operand.vmem [shape: f32[256,128], index: 2, kind: input, shape index: {}]
  %s3 = inlined_call_operand.vmem [shape: f32[1,128], index: 3, kind: input, shape index: {}]
  %s4 = inlined_call_operand.vmem [shape: f32[256,128], index: 4, kind: output, shape index: {}]
  %s5 = sld [smem:[#allocation0]]
  $region34: #{gcn_dgl_forward.5} parent=0
    _
  %s7 = ssub.s32 1, %s5
  %s8 = scalar_select 0, %s7, %s5
  // Predicated region
  $region2: #{gcn_dgl_forward.5} parent=0 // pred_check
    _
  $region3: #{gcn_dgl_forward.5} parent=0 // pred_check_branch
    %10 = sbr.rel (0) target = $region5
  $region4: #{gcn_dgl_forward.5} parent=0 // pred_region
    _
  $region5: #{gcn_dgl_forward.5} parent=0 // pred_fallthru
    _
  // Predicated region
  $region6: #{gcn_dgl_forward.5} parent=0 // pred_check
    _
  $region7: #{gcn_dgl_forward.5} parent=0 // pred_check_branch
    %12 = sbr.rel (0) target = $region9
  $region8: #{gcn_dgl_forward.5} parent=0 // pred_region
    _
  $region9: #{gcn_dgl_forward.5} parent=0 // pred_fallthru
    _
  // Predicated region
  $region10: #{gcn_dgl_forward.5} parent=0 // pred_check
    _
  $region11: #{gcn_dgl_forward.5} parent=0 // pred_check_branch
    %14 = sbr.rel (0) target = $region13
  $region12: #{gcn_dgl_forward.5} parent=0 // pred_region
    _
  $region13: #{gcn_dgl_forward.5} parent=0 // pred_fallthru
    _
  // Predicated region
  $region14: #{gcn_dgl_forward.5} parent=0 // pred_check
    _
  $region15: #{gcn_dgl_forward.5} parent=0 // pred_check_branch
    %16 = sbr.rel (0) target = $region17
  $region16: #{gcn_dgl_forward.5} parent=0 // pred_region
    _
  $region17: #{gcn_dgl_forward.5} parent=0 // pred_fallthru
    _
  %p17 = scmp.eq.s32.totalorder 0, 0
  // Predicated region
  $region18: #{gcn_dgl_forward.5} parent=0 // pred_check
    %p18 = pneg %p17
  $region19: #{gcn_dgl_forward.5} parent=0 // pred_check_branch
    %20 = sbr.rel (%p18) target = $region21
  $region20: #{gcn_dgl_forward.5} parent=0 // pred_region
    %21 = vst [vmem:[#allocation2] sm:$0xff] 0.0
    %22 = vst [vmem:[#allocation2 + $0x8] sm:$0xff] 0.0
    %23 = vst [vmem:[#allocation2 + $0x10] sm:$0xff] 0.0
    %24 = vst [vmem:[#allocation2 + $0x18] sm:$0xff] 0.0
    %25 = vst [vmem:[#allocation2 + $0x20] sm:$0xff] 0.0
    %26 = vst [vmem:[#allocation2 + $0x28] sm:$0xff] 0.0
    %27 = vst [vmem:[#allocation2 + $0x30] sm:$0xff] 0.0
    %28 = vst [vmem:[#allocation2 + $0x38] sm:$0xff] 0.0
    %29 = vst [vmem:[#allocation2 + $0x40] sm:$0xff] 0.0
    %30 = vst [vmem:[#allocation2 + $0x48] sm:$0xff] 0.0
    %31 = vst [vmem:[#allocation2 + $0x50] sm:$0xff] 0.0
    %32 = vst [vmem:[#allocation2 + $0x58] sm:$0xff] 0.0
    %33 = vst [vmem:[#allocation2 + $0x60] sm:$0xff] 0.0
    %34 = vst [vmem:[#allocation2 + $0x68] sm:$0xff] 0.0
    %35 = vst [vmem:[#allocation2 + $0x70] sm:$0xff] 0.0
    %36 = vst [vmem:[#allocation2 + $0x78] sm:$0xff] 0.0
    %37 = vst [vmem:[#allocation2 + $0x80] sm:$0xff] 0.0
    %38 = vst [vmem:[#allocation2 + $0x88] sm:$0xff] 0.0
    %39 = vst [vmem:[#allocation2 + $0x90] sm:$0xff] 0.0
    %40 = vst [vmem:[#allocation2 + $0x98] sm:$0xff] 0.0
    %41 = vst [vmem:[#allocation2 + $0xa0] sm:$0xff] 0.0
    %42 = vst [vmem:[#allocation2 + $0xa8] sm:$0xff] 0.0
    %43 = vst [vmem:[#allocation2 + $0xb0] sm:$0xff] 0.0
    %44 = vst [vmem:[#allocation2 + $0xb8] sm:$0xff] 0.0
    %45 = vst [vmem:[#allocation2 + $0xc0] sm:$0xff] 0.0
    %46 = vst [vmem:[#allocation2 + $0xc8] sm:$0xff] 0.0
    %47 = vst [vmem:[#allocation2 + $0xd0] sm:$0xff] 0.0
    %48 = vst [vmem:[#allocation2 + $0xd8] sm:$0xff] 0.0
    %49 = vst [vmem:[#allocation2 + $0xe0] sm:$0xff] 0.0
    %50 = vst [vmem:[#allocation2 + $0xe8] sm:$0xff] 0.0
    %51 = vst [vmem:[#allocation2 + $0xf0] sm:$0xff] 0.0
    %52 = vst [vmem:[#allocation2 + $0xf8] sm:$0xff] 0.0
  $region21: #{gcn_dgl_forward.5} parent=0 // pred_fallthru
    _
  %v53 = vld [vmem:[#allocation2] sm:$0xff]
  %v54 = vld [vmem:[#allocation2 + $0x8] sm:$0xff]
  %v55 = vld [vmem:[#allocation2 + $0x10] sm:$0xff]
  %v56 = vld [vmem:[#allocation2 + $0x18] sm:$0xff]
  %v57 = vld [vmem:[#allocation2 + $0x20] sm:$0xff]
  %v58 = vld [vmem:[#allocation2 + $0x28] sm:$0xff]
  %v59 = vld [vmem:[#allocation2 + $0x30] sm:$0xff]
  %v60 = vld [vmem:[#allocation2 + $0x38] sm:$0xff]
  %v61 = vld [vmem:[#allocation2 + $0x40] sm:$0xff]
  %v62 = vld [vmem:[#allocation2 + $0x48] sm:$0xff]
  %v63 = vld [vmem:[#allocation2 + $0x50] sm:$0xff]
  %v64 = vld [vmem:[#allocation2 + $0x58] sm:$0xff]
  %v65 = vld [vmem:[#allocation2 + $0x60] sm:$0xff]
  %v66 = vld [vmem:[#allocation2 + $0x68] sm:$0xff]
  %v67 = vld [vmem:[#allocation2 + $0x70] sm:$0xff]
  %v68 = vld [vmem:[#allocation2 + $0x78] sm:$0xff]
  %v69 = vld [vmem:[#allocation2 + $0x80] sm:$0xff]
  %v70 = vld [vmem:[#allocation2 + $0x88] sm:$0xff]
  %v71 = vld [vmem:[#allocation2 + $0x90] sm:$0xff]
  %v72 = vld [vmem:[#allocation2 + $0x98] sm:$0xff]
  %v73 = vld [vmem:[#allocation2 + $0xa0] sm:$0xff]
  %v74 = vld [vmem:[#allocation2 + $0xa8] sm:$0xff]
  %v75 = vld [vmem:[#allocation2 + $0xb0] sm:$0xff]
  %v76 = vld [vmem:[#allocation2 + $0xb8] sm:$0xff]
  %v77 = vld [vmem:[#allocation2 + $0xc0] sm:$0xff]
  %v78 = vld [vmem:[#allocation2 + $0xc8] sm:$0xff]
  %v79 = vld [vmem:[#allocation2 + $0xd0] sm:$0xff]
  %v80 = vld [vmem:[#allocation2 + $0xd8] sm:$0xff]
  %v81 = vld [vmem:[#allocation2 + $0xe0] sm:$0xff]
  %v82 = vld [vmem:[#allocation2 + $0xe8] sm:$0xff]
  %v83 = vld [vmem:[#allocation2 + $0xf0] sm:$0xff]
  %v84 = vld [vmem:[#allocation2 + $0xf8] sm:$0xff]
  %v85 = vld [vmem:[%s1] sm:$0xff]
  %v86 = vld [vmem:[%s1 + $0x8] sm:$0xff]
  %v87 = vld [vmem:[%s1 + $0x10] sm:$0xff]
  %v88 = vld [vmem:[%s1 + $0x18] sm:$0xff]
  %v89 = vld [vmem:[%s1 + $0x20] sm:$0xff]
  %v90 = vld [vmem:[%s1 + $0x28] sm:$0xff]
  %v91 = vld [vmem:[%s1 + $0x30] sm:$0xff]
  %v92 = vld [vmem:[%s1 + $0x38] sm:$0xff]
  %v93 = vld [vmem:[%s1 + $0x40] sm:$0xff]
  %v94 = vld [vmem:[%s1 + $0x48] sm:$0xff]
  %v95 = vld [vmem:[%s1 + $0x50] sm:$0xff]
  %v96 = vld [vmem:[%s1 + $0x58] sm:$0xff]
  %v97 = vld [vmem:[%s1 + $0x60] sm:$0xff]
  %v98 = vld [vmem:[%s1 + $0x68] sm:$0xff]
  %v99 = vld [vmem:[%s1 + $0x70] sm:$0xff]
  %v100 = vld [vmem:[%s1 + $0x78] sm:$0xff]
  %v101 = vld [vmem:[%s1 + $0x80] sm:$0xff]
  %v102 = vld [vmem:[%s1 + $0x88] sm:$0xff]
  %v103 = vld [vmem:[%s1 + $0x90] sm:$0xff]
  %v104 = vld [vmem:[%s1 + $0x98] sm:$0xff]
  %v105 = vld [vmem:[%s1 + $0xa0] sm:$0xff]
  %v106 = vld [vmem:[%s1 + $0xa8] sm:$0xff]
  %v107 = vld [vmem:[%s1 + $0xb0] sm:$0xff]
  %v108 = vld [vmem:[%s1 + $0xb8] sm:$0xff]
  %v109 = vld [vmem:[%s1 + $0xc0] sm:$0xff]
  %v110 = vld [vmem:[%s1 + $0xc8] sm:$0xff]
  %v111 = vld [vmem:[%s1 + $0xd0] sm:$0xff]
  %v112 = vld [vmem:[%s1 + $0xd8] sm:$0xff]
  %v113 = vld [vmem:[%s1 + $0xe0] sm:$0xff]
  %v114 = vld [vmem:[%s1 + $0xe8] sm:$0xff]
  %v115 = vld [vmem:[%s1 + $0xf0] sm:$0xff]
  %v116 = vld [vmem:[%s1 + $0xf8] sm:$0xff]
  %v117 = vld [vmem:[%s1 + $0x100] sm:$0xff]
  %v118 = vld [vmem:[%s1 + $0x108] sm:$0xff]
  %v119 = vld [vmem:[%s1 + $0x110] sm:$0xff]
  %v120 = vld [vmem:[%s1 + $0x118] sm:$0xff]
  %v121 = vld [vmem:[%s1 + $0x120] sm:$0xff]
  %v122 = vld [vmem:[%s1 + $0x128] sm:$0xff]
  %v123 = vld [vmem:[%s1 + $0x130] sm:$0xff]
  %v124 = vld [vmem:[%s1 + $0x138] sm:$0xff]
  %v125 = vld [vmem:[%s1 + $0x140] sm:$0xff]
  %v126 = vld [vmem:[%s1 + $0x148] sm:$0xff]
  %v127 = vld [vmem:[%s1 + $0x150] sm:$0xff]
  %v128 = vld [vmem:[%s1 + $0x158] sm:$0xff]
  %v129 = vld [vmem:[%s1 + $0x160] sm:$0xff]
  %v130 = vld [vmem:[%s1 + $0x168] sm:$0xff]
  %v131 = vld [vmem:[%s1 + $0x170] sm:$0xff]
  %v132 = vld [vmem:[%s1 + $0x178] sm:$0xff]
  %v133 = vld [vmem:[%s1 + $0x180] sm:$0xff]
  %v134 = vld [vmem:[%s1 + $0x188] sm:$0xff]
  %v135 = vld [vmem:[%s1 + $0x190] sm:$0xff]
  %v136 = vld [vmem:[%s1 + $0x198] sm:$0xff]
  %v137 = vld [vmem:[%s1 + $0x1a0] sm:$0xff]
  %v138 = vld [vmem:[%s1 + $0x1a8] sm:$0xff]
  %v139 = vld [vmem:[%s1 + $0x1b0] sm:$0xff]
  %v140 = vld [vmem:[%s1 + $0x1b8] sm:$0xff]
  %v141 = vld [vmem:[%s1 + $0x1c0] sm:$0xff]
  %v142 = vld [vmem:[%s1 + $0x1c8] sm:$0xff]
  %v143 = vld [vmem:[%s1 + $0x1d0] sm:$0xff]
  %v144 = vld [vmem:[%s1 + $0x1d8] sm:$0xff]
  %v145 = vld [vmem:[%s1 + $0x1e0] sm:$0xff]
  %v146 = vld [vmem:[%s1 + $0x1e8] sm:$0xff]
  %v147 = vld [vmem:[%s1 + $0x1f0] sm:$0xff]
  %v148 = vld [vmem:[%s1 + $0x1f8] sm:$0xff]
  %v149 = vld [vmem:[%s2] sm:$0xff]
  %v150 = vld [vmem:[%s2 + $0x8] sm:$0xff]
  %v151 = vld [vmem:[%s2 + $0x10] sm:$0xff]
  %v152 = vld [vmem:[%s2 + $0x18] sm:$0xff]
  %v153 = vld [vmem:[%s2 + $0x20] sm:$0xff]
  %v154 = vld [vmem:[%s2 + $0x28] sm:$0xff]
  %v155 = vld [vmem:[%s2 + $0x30] sm:$0xff]
  %v156 = vld [vmem:[%s2 + $0x38] sm:$0xff]
  %v157 = vld [vmem:[%s2 + $0x40] sm:$0xff]
  %v158 = vld [vmem:[%s2 + $0x48] sm:$0xff]
  %v159 = vld [vmem:[%s2 + $0x50] sm:$0xff]
  %v160 = vld [vmem:[%s2 + $0x58] sm:$0xff]
  %v161 = vld [vmem:[%s2 + $0x60] sm:$0xff]
  %v162 = vld [vmem:[%s2 + $0x68] sm:$0xff]
  %v163 = vld [vmem:[%s2 + $0x70] sm:$0xff]
  %v164 = vld [vmem:[%s2 + $0x78] sm:$0xff]
  %v165 = vld [vmem:[%s2 + $0x80] sm:$0xff]
  %v166 = vld [vmem:[%s2 + $0x88] sm:$0xff]
  %v167 = vld [vmem:[%s2 + $0x90] sm:$0xff]
  %v168 = vld [vmem:[%s2 + $0x98] sm:$0xff]
  %v169 = vld [vmem:[%s2 + $0xa0] sm:$0xff]
  %v170 = vld [vmem:[%s2 + $0xa8] sm:$0xff]
  %v171 = vld [vmem:[%s2 + $0xb0] sm:$0xff]
  %v172 = vld [vmem:[%s2 + $0xb8] sm:$0xff]
  %v173 = vld [vmem:[%s2 + $0xc0] sm:$0xff]
  %v174 = vld [vmem:[%s2 + $0xc8] sm:$0xff]
  %v175 = vld [vmem:[%s2 + $0xd0] sm:$0xff]
  %v176 = vld [vmem:[%s2 + $0xd8] sm:$0xff]
  %v177 = vld [vmem:[%s2 + $0xe0] sm:$0xff]
  %v178 = vld [vmem:[%s2 + $0xe8] sm:$0xff]
  %v179 = vld [vmem:[%s2 + $0xf0] sm:$0xff]
  %v180 = vld [vmem:[%s2 + $0xf8] sm:$0xff]
  %181 = vmatprep.subr.mxu0 0.0
  %182 = vmatpush1.msra.mxu0 %v164
  %183 = vmatprep.subr.mxu0 0.0
  %184 = vmatpush1.msra.mxu0 %v163
  %185 = vmatprep.subr.mxu0 0.0
  %186 = vmatpush1.msra.mxu0 %v162
  %187 = vmatprep.subr.mxu0 0.0
  %188 = vmatpush1.msra.mxu0 %v161
  %189 = vmatprep.subr.mxu0 0.0
  %190 = vmatpush1.msra.mxu0 %v160
  %191 = vmatprep.subr.mxu0 0.0
  %192 = vmatpush1.msra.mxu0 %v159
  %193 = vmatprep.subr.mxu0 0.0
  %194 = vmatpush1.msra.mxu0 %v158
  %195 = vmatprep.subr.mxu0 0.0
  %196 = vmatpush1.msra.mxu0 %v157
  %197 = vmatprep.subr.mxu0 0.0
  %198 = vmatpush1.msra.mxu0 %v156
  %199 = vmatprep.subr.mxu0 0.0
  %200 = vmatpush1.msra.mxu0 %v155
  %201 = vmatprep.subr.mxu0 0.0
  %202 = vmatpush1.msra.mxu0 %v154
  %203 = vmatprep.subr.mxu0 0.0
  %204 = vmatpush1.msra.mxu0 %v153
  %205 = vmatprep.subr.mxu0 0.0
  %206 = vmatpush1.msra.mxu0 %v152
  %207 = vmatprep.subr.mxu0 0.0
  %208 = vmatpush1.msra.mxu0 %v151
  %209 = vmatprep.subr.mxu0 0.0
  %210 = vmatpush1.msra.mxu0 %v150
  %211 = vmatprep.subr.mxu0 0.0
  %212 = vmatpush1.msra.mxu0 %v149
  %213 = vmatprep.subr.mxu0 0.0
  %214 = vmatpush2.msra.mxu0 %v180
  %215 = vmatprep.subr.mxu0 0.0
  %216 = vmatpush2.msra.mxu0 %v179
  %217 = vmatprep.subr.mxu0 0.0
  %218 = vmatpush2.msra.mxu0 %v178
  %219 = vmatprep.subr.mxu0 0.0
  %220 = vmatpush2.msra.mxu0 %v177
  %221 = vmatprep.subr.mxu0 0.0
  %222 = vmatpush2.msra.mxu0 %v176
  %223 = vmatprep.subr.mxu0 0.0
  %224 = vmatpush2.msra.mxu0 %v175
  %225 = vmatprep.subr.mxu0 0.0
  %226 = vmatpush2.msra.mxu0 %v174
  %227 = vmatprep.subr.mxu0 0.0
  %228 = vmatpush2.msra.mxu0 %v173
  %229 = vmatprep.subr.mxu0 0.0
  %230 = vmatpush2.msra.mxu0 %v172
  %231 = vmatprep.subr.mxu0 0.0
  %232 = vmatpush2.msra.mxu0 %v171
  %233 = vmatprep.subr.mxu0 0.0
  %234 = vmatpush2.msra.mxu0 %v170
  %235 = vmatprep.subr.mxu0 0.0
  %236 = vmatpush2.msra.mxu0 %v169
  %237 = vmatprep.subr.mxu0 0.0
  %238 = vmatpush2.msra.mxu0 %v168
  %239 = vmatprep.subr.mxu0 0.0
  %240 = vmatpush2.msra.mxu0 %v167
  %241 = vmatprep.subr.mxu0 0.0
  %242 = vmatpush2.msra.mxu0 %v166
  %243 = vmatprep.subr.mxu0 0.0
  %244 = vmatpush2.msra.mxu0 %v165
  %245 = vmatprep.mubr.f32.mxu0 %v86
  %246 = vmatmul.mubr.f32.gmra.mxu0 %v85
  %v247 = vpop.f32.mrf.mxu0
  %v248 = vadd.f32 0.0, %v247
  %v249 = vpop.f32.mrf.mxu0
  %250 = vmatprep.mubr.f32.mxu0 %v88
  %251 = vmatmul.mubr.f32.gmra.mxu0 %v87
  %v252 = vpop.f32.mrf.mxu0
  %v253 = vadd.f32 0.0, %v252
  %v254 = vpop.f32.mrf.mxu0
  %255 = vmatprep.mubr.f32.mxu0 %v90
  %256 = vmatmul.mubr.f32.gmra.mxu0 %v89
  %v257 = vpop.f32.mrf.mxu0
  %v258 = vadd.f32 0.0, %v257
  %v259 = vpop.f32.mrf.mxu0
  %260 = vmatprep.mubr.f32.mxu0 %v92
  %261 = vmatmul.mubr.f32.gmra.mxu0 %v91
  %v262 = vpop.f32.mrf.mxu0
  %v263 = vadd.f32 0.0, %v262
  %v264 = vpop.f32.mrf.mxu0
  %265 = vmatprep.mubr.f32.mxu0 %v94
  %266 = vmatmul.mubr.f32.gmra.mxu0 %v93
  %v267 = vpop.f32.mrf.mxu0
  %v268 = vadd.f32 0.0, %v267
  %v269 = vpop.f32.mrf.mxu0
  %270 = vmatprep.mubr.f32.mxu0 %v96
  %271 = vmatmul.mubr.f32.gmra.mxu0 %v95
  %v272 = vpop.f32.mrf.mxu0
  %v273 = vadd.f32 0.0, %v272
  %v274 = vpop.f32.mrf.mxu0
  %275 = vmatprep.mubr.f32.mxu0 %v98
  %276 = vmatmul.mubr.f32.gmra.mxu0 %v97
  %v277 = vpop.f32.mrf.mxu0
  %v278 = vadd.f32 0.0, %v277
  %v279 = vpop.f32.mrf.mxu0
  %280 = vmatprep.mubr.f32.mxu0 %v100
  %281 = vmatmul.mubr.f32.gmra.mxu0 %v99
  %v282 = vpop.f32.mrf.mxu0
  %v283 = vadd.f32 0.0, %v282
  %v284 = vpop.f32.mrf.mxu0
  %285 = vmatprep.mubr.f32.mxu0 %v102
  %286 = vmatmul.mubr.f32.gmra.mxu0 %v101
  %v287 = vpop.f32.mrf.mxu0
  %v288 = vadd.f32 0.0, %v287
  %v289 = vpop.f32.mrf.mxu0
  %290 = vmatprep.mubr.f32.mxu0 %v104
  %291 = vmatmul.mubr.f32.gmra.mxu0 %v103
  %v292 = vpop.f32.mrf.mxu0
  %v293 = vadd.f32 0.0, %v292
  %v294 = vpop.f32.mrf.mxu0
  %295 = vmatprep.mubr.f32.mxu0 %v106
  %296 = vmatmul.mubr.f32.gmra.mxu0 %v105
  %v297 = vpop.f32.mrf.mxu0
  %v298 = vadd.f32 0.0, %v297
  %v299 = vpop.f32.mrf.mxu0
  %300 = vmatprep.mubr.f32.mxu0 %v108
  %301 = vmatmul.mubr.f32.gmra.mxu0 %v107
  %v302 = vpop.f32.mrf.mxu0
  %v303 = vadd.f32 0.0, %v302
  %v304 = vpop.f32.mrf.mxu0
  %305 = vmatprep.mubr.f32.mxu0 %v110
  %306 = vmatmul.mubr.f32.gmra.mxu0 %v109
  %v307 = vpop.f32.mrf.mxu0
  %v308 = vadd.f32 0.0, %v307
  %v309 = vpop.f32.mrf.mxu0
  %310 = vmatprep.mubr.f32.mxu0 %v112
  %311 = vmatmul.mubr.f32.gmra.mxu0 %v111
  %v312 = vpop.f32.mrf.mxu0
  %v313 = vadd.f32 0.0, %v312
  %v314 = vpop.f32.mrf.mxu0
  %315 = vmatprep.mubr.f32.mxu0 %v114
  %316 = vmatmul.mubr.f32.gmra.mxu0 %v113
  %v317 = vpop.f32.mrf.mxu0
  %v318 = vadd.f32 0.0, %v317
  %v319 = vpop.f32.mrf.mxu0
  %320 = vmatprep.mubr.f32.mxu0 %v116
  %321 = vmatmul.mubr.f32.gmra.mxu0 %v115
  %v322 = vpop.f32.mrf.mxu0
  %v323 = vadd.f32 0.0, %v322
  %v324 = vpop.f32.mrf.mxu0
  %325 = vmatprep.mubr.f32.mxu0 %v118
  %326 = vmatmul.mubr.f32.gmra.mxu0 %v117
  %v327 = vpop.f32.mrf.mxu0
  %v328 = vadd.f32 0.0, %v327
  %v329 = vpop.f32.mrf.mxu0
  %330 = vmatprep.mubr.f32.mxu0 %v120
  %331 = vmatmul.mubr.f32.gmra.mxu0 %v119
  %v332 = vpop.f32.mrf.mxu0
  %v333 = vadd.f32 0.0, %v332
  %v334 = vpop.f32.mrf.mxu0
  %335 = vmatprep.mubr.f32.mxu0 %v122
  %336 = vmatmul.mubr.f32.gmra.mxu0 %v121
  %v337 = vpop.f32.mrf.mxu0
  %v338 = vadd.f32 0.0, %v337
  %v339 = vpop.f32.mrf.mxu0
  %340 = vmatprep.mubr.f32.mxu0 %v124
  %341 = vmatmul.mubr.f32.gmra.mxu0 %v123
  %v342 = vpop.f32.mrf.mxu0
  %v343 = vadd.f32 0.0, %v342
  %v344 = vpop.f32.mrf.mxu0
  %345 = vmatprep.mubr.f32.mxu0 %v126
  %346 = vmatmul.mubr.f32.gmra.mxu0 %v125
  %v347 = vpop.f32.mrf.mxu0
  %v348 = vadd.f32 0.0, %v347
  %v349 = vpop.f32.mrf.mxu0
  %350 = vmatprep.mubr.f32.mxu0 %v128
  %351 = vmatmul.mubr.f32.gmra.mxu0 %v127
  %v352 = vpop.f32.mrf.mxu0
  %v353 = vadd.f32 0.0, %v352
  %v354 = vpop.f32.mrf.mxu0
  %355 = vmatprep.mubr.f32.mxu0 %v130
  %356 = vmatmul.mubr.f32.gmra.mxu0 %v129
  %v357 = vpop.f32.mrf.mxu0
  %v358 = vadd.f32 0.0, %v357
  %v359 = vpop.f32.mrf.mxu0
  %360 = vmatprep.mubr.f32.mxu0 %v132
  %361 = vmatmul.mubr.f32.gmra.mxu0 %v131
  %v362 = vpop.f32.mrf.mxu0
  %v363 = vadd.f32 0.0, %v362
  %v364 = vpop.f32.mrf.mxu0
  %365 = vmatprep.mubr.f32.mxu0 %v134
  %366 = vmatmul.mubr.f32.gmra.mxu0 %v133
  %v367 = vpop.f32.mrf.mxu0
  %v368 = vadd.f32 0.0, %v367
  %v369 = vpop.f32.mrf.mxu0
  %370 = vmatprep.mubr.f32.mxu0 %v136
  %371 = vmatmul.mubr.f32.gmra.mxu0 %v135
  %v372 = vpop.f32.mrf.mxu0
  %v373 = vadd.f32 0.0, %v372
  %v374 = vpop.f32.mrf.mxu0
  %375 = vmatprep.mubr.f32.mxu0 %v138
  %376 = vmatmul.mubr.f32.gmra.mxu0 %v137
  %v377 = vpop.f32.mrf.mxu0
  %v378 = vadd.f32 0.0, %v377
  %v379 = vpop.f32.mrf.mxu0
  %380 = vmatprep.mubr.f32.mxu0 %v140
  %381 = vmatmul.mubr.f32.gmra.mxu0 %v139
  %v382 = vpop.f32.mrf.mxu0
  %v383 = vadd.f32 0.0, %v382
  %v384 = vpop.f32.mrf.mxu0
  %385 = vmatprep.mubr.f32.mxu0 %v142
  %386 = vmatmul.mubr.f32.gmra.mxu0 %v141
  %v387 = vpop.f32.mrf.mxu0
  %v388 = vadd.f32 0.0, %v387
  %v389 = vpop.f32.mrf.mxu0
  %390 = vmatprep.mubr.f32.mxu0 %v144
  %391 = vmatmul.mubr.f32.gmra.mxu0 %v143
  %v392 = vpop.f32.mrf.mxu0
  %v393 = vadd.f32 0.0, %v392
  %v394 = vpop.f32.mrf.mxu0
  %395 = vmatprep.mubr.f32.mxu0 %v146
  %396 = vmatmul.mubr.f32.gmra.mxu0 %v145
  %v397 = vpop.f32.mrf.mxu0
  %v398 = vadd.f32 0.0, %v397
  %v399 = vpop.f32.mrf.mxu0
  %400 = vmatprep.mubr.f32.mxu0 %v148
  %401 = vmatmul.mubr.f32.gmra.mxu0 %v147
  %v402 = vpop.f32.mrf.mxu0
  %v403 = vadd.f32 0.0, %v402
  %v404 = vpop.f32.mrf.mxu0
  %405 = vdwg.mxu0
  %v406 = vadd.f32 %v53, %v248
  %v407 = vadd.f32 %v54, %v253
  %v408 = vadd.f32 %v55, %v258
  %v409 = vadd.f32 %v56, %v263
  %v410 = vadd.f32 %v57, %v268
  %v411 = vadd.f32 %v58, %v273
  %v412 = vadd.f32 %v59, %v278
  %v413 = vadd.f32 %v60, %v283
  %v414 = vadd.f32 %v61, %v288
  %v415 = vadd.f32 %v62, %v293
  %v416 = vadd.f32 %v63, %v298
  %v417 = vadd.f32 %v64, %v303
  %v418 = vadd.f32 %v65, %v308
  %v419 = vadd.f32 %v66, %v313
  %v420 = vadd.f32 %v67, %v318
  %v421 = vadd.f32 %v68, %v323
  %v422 = vadd.f32 %v69, %v328
  %v423 = vadd.f32 %v70, %v333
  %v424 = vadd.f32 %v71, %v338
  %v425 = vadd.f32 %v72, %v343
  %v426 = vadd.f32 %v73, %v348
  %v427 = vadd.f32 %v74, %v353
  %v428 = vadd.f32 %v75, %v358
  %v429 = vadd.f32 %v76, %v363
  %v430 = vadd.f32 %v77, %v368
  %v431 = vadd.f32 %v78, %v373
  %v432 = vadd.f32 %v79, %v378
  %v433 = vadd.f32 %v80, %v383
  %v434 = vadd.f32 %v81, %v388
  %v435 = vadd.f32 %v82, %v393
  %v436 = vadd.f32 %v83, %v398
  %v437 = vadd.f32 %v84, %v403
  %438 = vst [vmem:[#allocation2] sm:$0xff] %v406
  %439 = vst [vmem:[#allocation2 + $0x8] sm:$0xff] %v407
  %440 = vst [vmem:[#allocation2 + $0x10] sm:$0xff] %v408
  %441 = vst [vmem:[#allocation2 + $0x18] sm:$0xff] %v409
  %442 = vst [vmem:[#allocation2 + $0x20] sm:$0xff] %v410
  %443 = vst [vmem:[#allocation2 + $0x28] sm:$0xff] %v411
  %444 = vst [vmem:[#allocation2 + $0x30] sm:$0xff] %v412
  %445 = vst [vmem:[#allocation2 + $0x38] sm:$0xff] %v413
  %446 = vst [vmem:[#allocation2 + $0x40] sm:$0xff] %v414
  %447 = vst [vmem:[#allocation2 + $0x48] sm:$0xff] %v415
  %448 = vst [vmem:[#allocation2 + $0x50] sm:$0xff] %v416
  %449 = vst [vmem:[#allocation2 + $0x58] sm:$0xff] %v417
  %450 = vst [vmem:[#allocation2 + $0x60] sm:$0xff] %v418
  %451 = vst [vmem:[#allocation2 + $0x68] sm:$0xff] %v419
  %452 = vst [vmem:[#allocation2 + $0x70] sm:$0xff] %v420
  %453 = vst [vmem:[#allocation2 + $0x78] sm:$0xff] %v421
  %454 = vst [vmem:[#allocation2 + $0x80] sm:$0xff] %v422
  %455 = vst [vmem:[#allocation2 + $0x88] sm:$0xff] %v423
  %456 = vst [vmem:[#allocation2 + $0x90] sm:$0xff] %v424
  %457 = vst [vmem:[#allocation2 + $0x98] sm:$0xff] %v425
  %458 = vst [vmem:[#allocation2 + $0xa0] sm:$0xff] %v426
  %459 = vst [vmem:[#allocation2 + $0xa8] sm:$0xff] %v427
  %460 = vst [vmem:[#allocation2 + $0xb0] sm:$0xff] %v428
  %461 = vst [vmem:[#allocation2 + $0xb8] sm:$0xff] %v429
  %462 = vst [vmem:[#allocation2 + $0xc0] sm:$0xff] %v430
  %463 = vst [vmem:[#allocation2 + $0xc8] sm:$0xff] %v431
  %464 = vst [vmem:[#allocation2 + $0xd0] sm:$0xff] %v432
  %465 = vst [vmem:[#allocation2 + $0xd8] sm:$0xff] %v433
  %466 = vst [vmem:[#allocation2 + $0xe0] sm:$0xff] %v434
  %467 = vst [vmem:[#allocation2 + $0xe8] sm:$0xff] %v435
  %468 = vst [vmem:[#allocation2 + $0xf0] sm:$0xff] %v436
  %469 = vst [vmem:[#allocation2 + $0xf8] sm:$0xff] %v437
  // Predicated region
  $region22: #{gcn_dgl_forward.5} parent=0 // pred_check
    %p470 = pneg %p17
  $region23: #{gcn_dgl_forward.5} parent=0 // pred_check_branch
    %472 = sbr.rel (%p470) target = $region25
  $region24: #{gcn_dgl_forward.5} parent=0 // pred_region
    %v473 = vld [vmem:[#allocation2] sm:$0xff]
    %v474 = vld [vmem:[#allocation2 + $0x8] sm:$0xff]
    %v475 = vld [vmem:[#allocation2 + $0x10] sm:$0xff]
    %v476 = vld [vmem:[#allocation2 + $0x18] sm:$0xff]
    %v477 = vld [vmem:[#allocation2 + $0x20] sm:$0xff]
    %v478 = vld [vmem:[#allocation2 + $0x28] sm:$0xff]
    %v479 = vld [vmem:[#allocation2 + $0x30] sm:$0xff]
    %v480 = vld [vmem:[#allocation2 + $0x38] sm:$0xff]
    %v481 = vld [vmem:[#allocation2 + $0x40] sm:$0xff]
    %v482 = vld [vmem:[#allocation2 + $0x48] sm:$0xff]
    %v483 = vld [vmem:[#allocation2 + $0x50] sm:$0xff]
    %v484 = vld [vmem:[#allocation2 + $0x58] sm:$0xff]
    %v485 = vld [vmem:[#allocation2 + $0x60] sm:$0xff]
    %v486 = vld [vmem:[#allocation2 + $0x68] sm:$0xff]
    %v487 = vld [vmem:[#allocation2 + $0x70] sm:$0xff]
    %v488 = vld [vmem:[#allocation2 + $0x78] sm:$0xff]
    %v489 = vld [vmem:[#allocation2 + $0x80] sm:$0xff]
    %v490 = vld [vmem:[#allocation2 + $0x88] sm:$0xff]
    %v491 = vld [vmem:[#allocation2 + $0x90] sm:$0xff]
    %v492 = vld [vmem:[#allocation2 + $0x98] sm:$0xff]
    %v493 = vld [vmem:[#allocation2 + $0xa0] sm:$0xff]
    %v494 = vld [vmem:[#allocation2 + $0xa8] sm:$0xff]
    %v495 = vld [vmem:[#allocation2 + $0xb0] sm:$0xff]
    %v496 = vld [vmem:[#allocation2 + $0xb8] sm:$0xff]
    %v497 = vld [vmem:[#allocation2 + $0xc0] sm:$0xff]
    %v498 = vld [vmem:[#allocation2 + $0xc8] sm:$0xff]
    %v499 = vld [vmem:[#allocation2 + $0xd0] sm:$0xff]
    %v500 = vld [vmem:[#allocation2 + $0xd8] sm:$0xff]
    %v501 = vld [vmem:[#allocation2 + $0xe0] sm:$0xff]
    %v502 = vld [vmem:[#allocation2 + $0xe8] sm:$0xff]
    %v503 = vld [vmem:[#allocation2 + $0xf0] sm:$0xff]
    %v504 = vld [vmem:[#allocation2 + $0xf8] sm:$0xff]
    %v505 = vld [vmem:[%s0] sm:$0xff]
    %v506 = vld [vmem:[%s0 + $0x8] sm:$0xff]
    %v507 = vld [vmem:[%s0 + $0x10] sm:$0xff]
    %v508 = vld [vmem:[%s0 + $0x18] sm:$0xff]
    %v509 = vld [vmem:[%s0 + $0x20] sm:$0xff]
    %v510 = vld [vmem:[%s0 + $0x28] sm:$0xff]
    %v511 = vld [vmem:[%s0 + $0x30] sm:$0xff]
    %v512 = vld [vmem:[%s0 + $0x38] sm:$0xff]
    %v513 = vld [vmem:[%s0 + $0x40] sm:$0xff]
    %v514 = vld [vmem:[%s0 + $0x48] sm:$0xff]
    %v515 = vld [vmem:[%s0 + $0x50] sm:$0xff]
    %v516 = vld [vmem:[%s0 + $0x58] sm:$0xff]
    %v517 = vld [vmem:[%s0 + $0x60] sm:$0xff]
    %v518 = vld [vmem:[%s0 + $0x68] sm:$0xff]
    %v519 = vld [vmem:[%s0 + $0x70] sm:$0xff]
    %v520 = vld [vmem:[%s0 + $0x78] sm:$0xff]
    %v521 = vld [vmem:[%s0 + $0x80] sm:$0xff]
    %v522 = vld [vmem:[%s0 + $0x88] sm:$0xff]
    %v523 = vld [vmem:[%s0 + $0x90] sm:$0xff]
    %v524 = vld [vmem:[%s0 + $0x98] sm:$0xff]
    %v525 = vld [vmem:[%s0 + $0xa0] sm:$0xff]
    %v526 = vld [vmem:[%s0 + $0xa8] sm:$0xff]
    %v527 = vld [vmem:[%s0 + $0xb0] sm:$0xff]
    %v528 = vld [vmem:[%s0 + $0xb8] sm:$0xff]
    %v529 = vld [vmem:[%s0 + $0xc0] sm:$0xff]
    %v530 = vld [vmem:[%s0 + $0xc8] sm:$0xff]
    %v531 = vld [vmem:[%s0 + $0xd0] sm:$0xff]
    %v532 = vld [vmem:[%s0 + $0xd8] sm:$0xff]
    %v533 = vld [vmem:[%s0 + $0xe0] sm:$0xff]
    %v534 = vld [vmem:[%s0 + $0xe8] sm:$0xff]
    %v535 = vld [vmem:[%s0 + $0xf0] sm:$0xff]
    %v536 = vld [vmem:[%s0 + $0xf8] sm:$0xff]
    %538 = vset.pattern.permute.xlu0 0
    %539 = vperm.xlu0 %538, %v505
    %v540 = vpop.permute.xlu0 %539
    %543 = vset.pattern.permute.xlu0 0
    %544 = vperm.xlu0 %543, %v506
    %v545 = vpop.permute.xlu0 %544
    %548 = vset.pattern.permute.xlu0 0
    %549 = vperm.xlu0 %548, %v507
    %v550 = vpop.permute.xlu0 %549
    %553 = vset.pattern.permute.xlu0 0
    %554 = vperm.xlu0 %553, %v508
    %v555 = vpop.permute.xlu0 %554
    %558 = vset.pattern.permute.xlu0 0
    %559 = vperm.xlu0 %558, %v509
    %v560 = vpop.permute.xlu0 %559
    %563 = vset.pattern.permute.xlu0 0
    %564 = vperm.xlu0 %563, %v510
    %v565 = vpop.permute.xlu0 %564
    %568 = vset.pattern.permute.xlu0 0
    %569 = vperm.xlu0 %568, %v511
    %v570 = vpop.permute.xlu0 %569
    %573 = vset.pattern.permute.xlu0 0
    %574 = vperm.xlu0 %573, %v512
    %v575 = vpop.permute.xlu0 %574
    %578 = vset.pattern.permute.xlu0 0
    %579 = vperm.xlu0 %578, %v513
    %v580 = vpop.permute.xlu0 %579
    %583 = vset.pattern.permute.xlu0 0
    %584 = vperm.xlu0 %583, %v514
    %v585 = vpop.permute.xlu0 %584
    %588 = vset.pattern.permute.xlu0 0
    %589 = vperm.xlu0 %588, %v515
    %v590 = vpop.permute.xlu0 %589
    %593 = vset.pattern.permute.xlu0 0
    %594 = vperm.xlu0 %593, %v516
    %v595 = vpop.permute.xlu0 %594
    %598 = vset.pattern.permute.xlu0 0
    %599 = vperm.xlu0 %598, %v517
    %v600 = vpop.permute.xlu0 %599
    %603 = vset.pattern.permute.xlu0 0
    %604 = vperm.xlu0 %603, %v518
    %v605 = vpop.permute.xlu0 %604
    %608 = vset.pattern.permute.xlu0 0
    %609 = vperm.xlu0 %608, %v519
    %v610 = vpop.permute.xlu0 %609
    %613 = vset.pattern.permute.xlu0 0
    %614 = vperm.xlu0 %613, %v520
    %v615 = vpop.permute.xlu0 %614
    %618 = vset.pattern.permute.xlu0 0
    %619 = vperm.xlu0 %618, %v521
    %v620 = vpop.permute.xlu0 %619
    %623 = vset.pattern.permute.xlu0 0
    %624 = vperm.xlu0 %623, %v522
    %v625 = vpop.permute.xlu0 %624
    %628 = vset.pattern.permute.xlu0 0
    %629 = vperm.xlu0 %628, %v523
    %v630 = vpop.permute.xlu0 %629
    %633 = vset.pattern.permute.xlu0 0
    %634 = vperm.xlu0 %633, %v524
    %v635 = vpop.permute.xlu0 %634
    %638 = vset.pattern.permute.xlu0 0
    %639 = vperm.xlu0 %638, %v525
    %v640 = vpop.permute.xlu0 %639
    %643 = vset.pattern.permute.xlu0 0
    %644 = vperm.xlu0 %643, %v526
    %v645 = vpop.permute.xlu0 %644
    %648 = vset.pattern.permute.xlu0 0
    %649 = vperm.xlu0 %648, %v527
    %v650 = vpop.permute.xlu0 %649
    %653 = vset.pattern.permute.xlu0 0
    %654 = vperm.xlu0 %653, %v528
    %v655 = vpop.permute.xlu0 %654
    %658 = vset.pattern.permute.xlu0 0
    %659 = vperm.xlu0 %658, %v529
    %v660 = vpop.permute.xlu0 %659
    %663 = vset.pattern.permute.xlu0 0
    %664 = vperm.xlu0 %663, %v530
    %v665 = vpop.permute.xlu0 %664
    %668 = vset.pattern.permute.xlu0 0
    %669 = vperm.xlu0 %668, %v531
    %v670 = vpop.permute.xlu0 %669
    %673 = vset.pattern.permute.xlu0 0
    %674 = vperm.xlu0 %673, %v532
    %v675 = vpop.permute.xlu0 %674
    %678 = vset.pattern.permute.xlu0 0
    %679 = vperm.xlu0 %678, %v533
    %v680 = vpop.permute.xlu0 %679
    %683 = vset.pattern.permute.xlu0 0
    %684 = vperm.xlu0 %683, %v534
    %v685 = vpop.permute.xlu0 %684
    %688 = vset.pattern.permute.xlu0 0
    %689 = vperm.xlu0 %688, %v535
    %v690 = vpop.permute.xlu0 %689
    %693 = vset.pattern.permute.xlu0 0
    %694 = vperm.xlu0 %693, %v536
    %v695 = vpop.permute.xlu0 %694
    %v697 = vmul.f32 %v473, %v540
    %v698 = vmul.f32 %v474, %v545
    %v699 = vmul.f32 %v475, %v550
    %v700 = vmul.f32 %v476, %v555
    %v701 = vmul.f32 %v477, %v560
    %v702 = vmul.f32 %v478, %v565
    %v703 = vmul.f32 %v479, %v570
    %v704 = vmul.f32 %v480, %v575
    %v705 = vmul.f32 %v481, %v580
    %v706 = vmul.f32 %v482, %v585
    %v707 = vmul.f32 %v483, %v590
    %v708 = vmul.f32 %v484, %v595
    %v709 = vmul.f32 %v485, %v600
    %v710 = vmul.f32 %v486, %v605
    %v711 = vmul.f32 %v487, %v610
    %v712 = vmul.f32 %v488, %v615
    %v713 = vmul.f32 %v489, %v620
    %v714 = vmul.f32 %v490, %v625
    %v715 = vmul.f32 %v491, %v630
    %v716 = vmul.f32 %v492, %v635
    %v717 = vmul.f32 %v493, %v640
    %v718 = vmul.f32 %v494, %v645
    %v719 = vmul.f32 %v495, %v650
    %v720 = vmul.f32 %v496, %v655
    %v721 = vmul.f32 %v497, %v660
    %v722 = vmul.f32 %v498, %v665
    %v723 = vmul.f32 %v499, %v670
    %v724 = vmul.f32 %v500, %v675
    %v725 = vmul.f32 %v501, %v680
    %v726 = vmul.f32 %v502, %v685
    %v727 = vmul.f32 %v503, %v690
    %v728 = vmul.f32 %v504, %v695
    %v729 = vld [vmem:[%s3] sm:$0x1]
    %v731 = vlaneseq
    %v732 = vshrl.u32 %v731, 7
    %v733 = vsub.s32 0, %v732
    %v734 = vrot.slane %v729, %v733
    %v736 = vadd.f32 %v697, %v734
    %v737 = vadd.f32 %v698, %v734
    %v738 = vadd.f32 %v699, %v734
    %v739 = vadd.f32 %v700, %v734
    %v740 = vadd.f32 %v701, %v734
    %v741 = vadd.f32 %v702, %v734
    %v742 = vadd.f32 %v703, %v734
    %v743 = vadd.f32 %v704, %v734
    %v744 = vadd.f32 %v705, %v734
    %v745 = vadd.f32 %v706, %v734
    %v746 = vadd.f32 %v707, %v734
    %v747 = vadd.f32 %v708, %v734
    %v748 = vadd.f32 %v709, %v734
    %v749 = vadd.f32 %v710, %v734
    %v750 = vadd.f32 %v711, %v734
    %v751 = vadd.f32 %v712, %v734
    %v752 = vadd.f32 %v713, %v734
    %v753 = vadd.f32 %v714, %v734
    %v754 = vadd.f32 %v715, %v734
    %v755 = vadd.f32 %v716, %v734
    %v756 = vadd.f32 %v717, %v734
    %v757 = vadd.f32 %v718, %v734
    %v758 = vadd.f32 %v719, %v734
    %v759 = vadd.f32 %v720, %v734
    %v760 = vadd.f32 %v721, %v734
    %v761 = vadd.f32 %v722, %v734
    %v762 = vadd.f32 %v723, %v734
    %v763 = vadd.f32 %v724, %v734
    %v764 = vadd.f32 %v725, %v734
    %v765 = vadd.f32 %v726, %v734
    %v766 = vadd.f32 %v727, %v734
    %v767 = vadd.f32 %v728, %v734
    %v768 = vmax.f32 %v736, 0.0
    %v769 = vmax.f32 %v737, 0.0
    %v770 = vmax.f32 %v738, 0.0
    %v771 = vmax.f32 %v739, 0.0
    %v772 = vmax.f32 %v740, 0.0
    %v773 = vmax.f32 %v741, 0.0
    %v774 = vmax.f32 %v742, 0.0
    %v775 = vmax.f32 %v743, 0.0
    %v776 = vmax.f32 %v744, 0.0
    %v777 = vmax.f32 %v745, 0.0
    %v778 = vmax.f32 %v746, 0.0
    %v779 = vmax.f32 %v747, 0.0
    %v780 = vmax.f32 %v748, 0.0
    %v781 = vmax.f32 %v749, 0.0
    %v782 = vmax.f32 %v750, 0.0
    %v783 = vmax.f32 %v751, 0.0
    %v784 = vmax.f32 %v752, 0.0
    %v785 = vmax.f32 %v753, 0.0
    %v786 = vmax.f32 %v754, 0.0
    %v787 = vmax.f32 %v755, 0.0
    %v788 = vmax.f32 %v756, 0.0
    %v789 = vmax.f32 %v757, 0.0
    %v790 = vmax.f32 %v758, 0.0
    %v791 = vmax.f32 %v759, 0.0
    %v792 = vmax.f32 %v760, 0.0
    %v793 = vmax.f32 %v761, 0.0
    %v794 = vmax.f32 %v762, 0.0
    %v795 = vmax.f32 %v763, 0.0
    %v796 = vmax.f32 %v764, 0.0
    %v797 = vmax.f32 %v765, 0.0
    %v798 = vmax.f32 %v766, 0.0
    %v799 = vmax.f32 %v767, 0.0
    %800 = vst [vmem:[%s4] sm:$0xff] %v768
    %801 = vst [vmem:[%s4 + $0x8] sm:$0xff] %v769
    %802 = vst [vmem:[%s4 + $0x10] sm:$0xff] %v770
    %803 = vst [vmem:[%s4 + $0x18] sm:$0xff] %v771
    %804 = vst [vmem:[%s4 + $0x20] sm:$0xff] %v772
    %805 = vst [vmem:[%s4 + $0x28] sm:$0xff] %v773
    %806 = vst [vmem:[%s4 + $0x30] sm:$0xff] %v774
    %807 = vst [vmem:[%s4 + $0x38] sm:$0xff] %v775
    %808 = vst [vmem:[%s4 + $0x40] sm:$0xff] %v776
    %809 = vst [vmem:[%s4 + $0x48] sm:$0xff] %v777
    %810 = vst [vmem:[%s4 + $0x50] sm:$0xff] %v778
    %811 = vst [vmem:[%s4 + $0x58] sm:$0xff] %v779
    %812 = vst [vmem:[%s4 + $0x60] sm:$0xff] %v780
    %813 = vst [vmem:[%s4 + $0x68] sm:$0xff] %v781
    %814 = vst [vmem:[%s4 + $0x70] sm:$0xff] %v782
    %815 = vst [vmem:[%s4 + $0x78] sm:$0xff] %v783
    %816 = vst [vmem:[%s4 + $0x80] sm:$0xff] %v784
    %817 = vst [vmem:[%s4 + $0x88] sm:$0xff] %v785
    %818 = vst [vmem:[%s4 + $0x90] sm:$0xff] %v786
    %819 = vst [vmem:[%s4 + $0x98] sm:$0xff] %v787
    %820 = vst [vmem:[%s4 + $0xa0] sm:$0xff] %v788
    %821 = vst [vmem:[%s4 + $0xa8] sm:$0xff] %v789
    %822 = vst [vmem:[%s4 + $0xb0] sm:$0xff] %v790
    %823 = vst [vmem:[%s4 + $0xb8] sm:$0xff] %v791
    %824 = vst [vmem:[%s4 + $0xc0] sm:$0xff] %v792
    %825 = vst [vmem:[%s4 + $0xc8] sm:$0xff] %v793
    %826 = vst [vmem:[%s4 + $0xd0] sm:$0xff] %v794
    %827 = vst [vmem:[%s4 + $0xd8] sm:$0xff] %v795
    %828 = vst [vmem:[%s4 + $0xe0] sm:$0xff] %v796
    %829 = vst [vmem:[%s4 + $0xe8] sm:$0xff] %v797
    %830 = vst [vmem:[%s4 + $0xf0] sm:$0xff] %v798
    %831 = vst [vmem:[%s4 + $0xf8] sm:$0xff] %v799
  $region25: #{gcn_dgl_forward.5} parent=0 // pred_fallthru
    _
  // Predicated region
  $region26: #{gcn_dgl_forward.5} parent=0 // pred_check
    _
  $region27: #{gcn_dgl_forward.5} parent=0 // pred_check_branch
    %833 = sbr.rel (0) target = $region29
  $region28: #{gcn_dgl_forward.5} parent=0 // pred_region
    _
  $region29: #{gcn_dgl_forward.5} parent=0 // pred_fallthru
    _
  // Predicated region
  $region30: #{gcn_dgl_forward.5} parent=0 // pred_check
    _
  $region31: #{gcn_dgl_forward.5} parent=0 // pred_check_branch
    %835 = sbr.rel (0) target = $region33
  $region32: #{gcn_dgl_forward.5} parent=0 // pred_region
    _
  $region33: #{gcn_dgl_forward.5} parent=0 // pred_fallthru
    _

</llo_original>
